<compile_context>
chip_gen: v5e
topology: v5e:2x2
jax: 0.10.0
libtpu: 0.0.40
codegen_flags: <defaults>
</compile_context>

<pallas_src>
import numpy as np
import jax
import jax.numpy as jnp
from jax import lax
from jax.experimental import pallas as pl
from jax.experimental.pallas import tpu as pltpu

D = 32           # hidden dim
H = 64           # FFN dim
TA = 16          # audio frames
TT = 8           # token sequence length
TP = 8           # phoneme sequence length
F_AUDIO = 16     # raw audio feature dim
VOCAB = 64       # text vocab size
N_PHONEMES = 32  # phoneme vocab size
NEG_INF = -1e9
INV_SQRT_D = 1.0 / float(np.sqrt(D))

# Encoder slots in the stacked weight slabs.
ENC_TOKEN, ENC_PHONEME, ENC_META, ENC_AUDIO = 0, 1, 2, 3


# ----------------------------------------------------------------------------
# Fused forward kernel: 4 encoders + word-span scatter + CLIP head
# ----------------------------------------------------------------------------
def _superclap_kernel(token_x_ref, phoneme_x_ref, audio_x_ref,
                      tok_bias_ref, phon_bias_ref, audio_bias_ref,
                      scatter_ref, sel_ref, pool_ref, scale_ref,
                      wsq_ref, w1_ref, w2_ref,
                      meta_norm_ref, audio_norm_ref, loss_ref):

    def encode(x, bias, i):
        # x: (B*T, D) flattened over batch; bias: (B*T, B*T) additive
        # (block-diagonal across batch + key-padding mask).
        win = wsq_ref[i, 0]
        wq = wsq_ref[i, 1]
        wk = wsq_ref[i, 2]
        wv = wsq_ref[i, 3]
        wo = wsq_ref[i, 4]
        w1 = w1_ref[i]
        w2 = w2_ref[i]

        h = jnp.dot(x, win, preferred_element_type=jnp.float32)
        q = jnp.dot(h, wq, preferred_element_type=jnp.float32)
        k = jnp.dot(h, wk, preferred_element_type=jnp.float32)
        v = jnp.dot(h, wv, preferred_element_type=jnp.float32)
        # scores[t, s] = <q_t, k_s> / sqrt(D) + bias[t, s]
        scores = lax.dot_general(q, k, (((1,), (1,)), ((), ())),
                                 preferred_element_type=jnp.float32)
        scores = scores * INV_SQRT_D + bias
        scores = scores - jnp.max(scores, axis=-1, keepdims=True)
        p = jnp.exp(scores)
        attn = p / jnp.sum(p, axis=-1, keepdims=True)
        a = jnp.dot(attn, v, preferred_element_type=jnp.float32)
        h2 = h + jnp.dot(a, wo, preferred_element_type=jnp.float32)
        ffn = jnp.dot(
            jnp.maximum(jnp.dot(h2, w1, preferred_element_type=jnp.float32), 0.0),
            w2, preferred_element_type=jnp.float32)
        return h2 + ffn

    token_out = encode(token_x_ref[...], tok_bias_ref[...], ENC_TOKEN)      # (B*Tt, D)
    phoneme_out = encode(phoneme_x_ref[...], phon_bias_ref[...], ENC_PHONEME)  # (B*Tp, D)

    # Word-level aggregation: static scatter matrix replaces the ragged loop.
    meta_in = phoneme_out + jnp.dot(scatter_ref[...], token_out,
                                    preferred_element_type=jnp.float32)

    meta_out = encode(meta_in, phon_bias_ref[...], ENC_META)                 # (B*Tp, D)
    audio_out = encode(audio_x_ref[...], audio_bias_ref[...], ENC_AUDIO)     # (B*Ta, D)

    # Audio mean over full time axis (matches torch .mean(dim=1), incl. padded
    # frames) and per-batch phoneme-index selection, both as small matmuls.
    a_mean = jnp.dot(pool_ref[...], audio_out, preferred_element_type=jnp.float32)  # (B, D)
    m_sel = jnp.dot(sel_ref[...], meta_out, preferred_element_type=jnp.float32)     # (B, D)

    eps = jnp.float32(1e-12)
    a_n = a_mean / jnp.maximum(
        jnp.sqrt(jnp.sum(a_mean * a_mean, axis=-1, keepdims=True)), eps)
    m_n = m_sel / jnp.maximum(
        jnp.sqrt(jnp.sum(m_sel * m_sel, axis=-1, keepdims=True)), eps)
    meta_norm_ref[...] = m_n
    audio_norm_ref[...] = a_n

    scale = scale_ref[0]                                   # scalar from SMEM
    logits = scale * lax.dot_general(a_n, m_n, (((1,), (1,)), ((), ())),
                                     preferred_element_type=jnp.float32)  # (B, B)
    bsz = logits.shape[0]
    rid = lax.broadcasted_iota(jnp.int32, (bsz, bsz), 0)
    cid = lax.broadcasted_iota(jnp.int32, (bsz, bsz), 1)
    eye = (rid == cid).astype(jnp.float32)

    # cross_entropy(logits_per_audio, arange(B)): rows
    diag_r = jnp.sum(logits * eye, axis=-1, keepdims=True)
    mx_r = jnp.max(logits, axis=-1, keepdims=True)
    lse_r = mx_r + jnp.log(jnp.sum(jnp.exp(logits - mx_r), axis=-1, keepdims=True))
    loss_a = lse_r - diag_r                                # (B, 1)

    # cross_entropy(logits_per_meta = logits.T, arange(B)): columns
    diag_c = jnp.sum(logits * eye, axis=0, keepdims=True)
    mx_c = jnp.max(logits, axis=0, keepdims=True)
    lse_c = mx_c + jnp.log(jnp.sum(jnp.exp(logits - mx_c), axis=0, keepdims=True))
    loss_m = lse_c - diag_c                                # (1, B)

    loss_ref[...] = (jnp.sum(loss_a, keepdims=True) +
                     jnp.sum(loss_m, keepdims=True)) / (2.0 * jnp.float32(bsz))


# ----------------------------------------------------------------------------
# Host / JAX glue
# ----------------------------------------------------------------------------
def flat_attn_bias(lengths, T):
    """Additive bias (B*T, B*T): 0 where query and key share a batch and the
    key position is valid, else -1e9 (block-diagonal + key padding)."""
    B = lengths.shape[0]
    idx = jnp.arange(B * T)
    batch_id = idx // T
    pos = idx % T
    same_batch = batch_id[:, None] == batch_id[None, :]
    key_valid = pos[None, :] < jnp.take(lengths, batch_id)[None, :]
    return jnp.where(same_batch & key_valid, 0.0, NEG_INF).astype(jnp.float32)


def build_scatter(word_token_lengths, word_phoneme_lengths, B, Tt, Tp):
    """Static (B*Tp, B*Tt) scatter matrix S so that S @ token_out adds each
    word's token-mean onto that word's phoneme span (span ints are host-known)."""
    S = np.zeros((B * Tp, B * Tt), dtype=np.float32)
    for i in range(B):
        phoneme_offset = 0
        token_offset = 0
        for tok_len, ph_len in zip(word_token_lengths[i], word_phoneme_lengths[i]):
            if tok_len > 0 and ph_len > 0:
                S[i * Tp + phoneme_offset: i * Tp + phoneme_offset + ph_len,
                  i * Tt + token_offset: i * Tt + token_offset + tok_len] = 1.0 / tok_len
            phoneme_offset += ph_len
            token_offset += tok_len
    return jnp.asarray(S)


def _stack_encoder_weights(params):
    """Pack 4 encoders x 7 weight tensors into 3 stacked slabs (fewer DMAs)."""
    encs = [params["token_encoder"], params["phoneme_encoder"],
            params["meta_encoder"], params["audio_encoder"]]

    def win_padded(p):
        w = p["win"]
        if w.shape[0] < D:
            w = jnp.pad(w, ((0, D - w.shape[0]), (0, 0)))
        return w

    wsq = jnp.stack([jnp.stack([win_padded(p), p["wq"], p["wk"], p["wv"], p["wo"]])
                     for p in encs]).astype(jnp.float32)        # (4, 5, D, D)
    w1s = jnp.stack([p["w1"] for p in encs]).astype(jnp.float32)  # (4, D, H)
    w2s = jnp.stack([p["w2"] for p in encs]).astype(jnp.float32)  # (4, H, D)
    return wsq, w1s, w2s


@jax.jit
def _forward_core(params, audio, audio_length, tokens, tokens_length,
                  phonemes, phonemes_length, scatter, phonemes_index):
    B, Ta, F = audio.shape
    Tt = tokens.shape[1]
    Tp = phonemes.shape[1]
    d = params["token_encoder"]["wq"].shape[0]

    token_x = jnp.take(params["token_emb"], tokens, axis=0).reshape(B * Tt, d)
    phoneme_x = jnp.take(params["phoneme_emb"], phonemes, axis=0).reshape(B * Tp, d)
    audio_x = audio.reshape(B * Ta, F).astype(jnp.float32)
    if F < d:  # zero-pad feature columns so the audio encoder shares the stacked win layout
        audio_x = jnp.pad(audio_x, ((0, 0), (0, d - F)))

    tok_bias = flat_attn_bias(tokens_length, Tt)
    phon_bias = flat_attn_bias(phonemes_length, Tp)
    audio_bias = flat_attn_bias(audio_length, Ta)

    # one-hot selector for meta_outputs[b, phonemes_index[b]]
    sel = jax.nn.one_hot(jnp.arange(B) * Tp + phonemes_index, B * Tp,
                         dtype=jnp.float32)                               # (B, B*Tp)
    # mean-pool matrix over time per batch (static)
    pool = jnp.asarray(np.kron(np.eye(B, dtype=np.float32),
                               np.full((1, Ta), 1.0 / Ta, np.float32)))   # (B, B*Ta)

    scale = jnp.exp(params["logit_scale"]).reshape(1).astype(jnp.float32)
    wsq, w1s, w2s = _stack_encoder_weights(params)

    args = (token_x, phoneme_x, audio_x, tok_bias, phon_bias, audio_bias,
            scatter, sel, pool, scale, wsq, w1s, w2s)

    vmem = pl.BlockSpec(memory_space=pltpu.MemorySpace.VMEM)
    smem = pl.BlockSpec(memory_space=pltpu.MemorySpace.SMEM)
    in_specs = [vmem] * len(args)
    in_specs[9] = smem   # logit scale scalar lives in SMEM

    meta_emb, audio_emb, loss = pl.pallas_call(
        _superclap_kernel,
        out_shape=(jax.ShapeDtypeStruct((B, d), jnp.float32),
                   jax.ShapeDtypeStruct((B, d), jnp.float32),
                   jax.ShapeDtypeStruct((1, 1), jnp.float32)),
        in_specs=in_specs,
        out_specs=(vmem, vmem, vmem),
    )(*args)
    return meta_emb, audio_emb, loss[0, 0]


def superclap_forward(params, *, audio, audio_length, tokens, tokens_length,
                      phonemes, phonemes_length, word_token_lengths,
                      word_phoneme_lengths, phonemes_index):
    B = audio.shape[0]
    Tt = tokens.shape[1]
    Tp = phonemes.shape[1]
    # Span boundaries are host-known static ints -> build scatter matrix on host.
    scatter = build_scatter(word_token_lengths, word_phoneme_lengths, B, Tt, Tp)
    return _forward_core(params, audio, audio_length, tokens, tokens_length,
                         phonemes, phonemes_length, scatter, phonemes_index)


def init_params(key):
    keys = jax.random.split(key, 40)
    kit = iter(keys)

    def nrm(shape, scale=0.05):
        return (scale * jax.random.normal(next(kit), shape)).astype(jnp.float32)

    def enc_params(din):
        return {"win": nrm((din, D)), "wq": nrm((D, D)), "wk": nrm((D, D)),
                "wv": nrm((D, D)), "wo": nrm((D, D)),
                "w1": nrm((D, H)), "w2": nrm((H, D))}

    return {
        "token_emb": nrm((VOCAB, D)),
        "phoneme_emb": nrm((N_PHONEMES, D)),
        "token_encoder": enc_params(D),
        "phoneme_encoder": enc_params(D),
        "meta_encoder": enc_params(D),
        "audio_encoder": enc_params(F_AUDIO),
        "logit_scale": jnp.asarray(np.log(1.0 / 0.07), dtype=jnp.float32),
    }


if __name__ == "__main__":
    key = jax.random.PRNGKey(0)
    kp, ka, kt, kph = jax.random.split(key, 4)
    params = init_params(kp)

    B = 2
    audio = jax.random.normal(ka, (B, TA, F_AUDIO), dtype=jnp.float32)
    audio_length = jnp.array([16, 12], dtype=jnp.int32)
    tokens = jax.random.randint(kt, (B, TT), 0, VOCAB, dtype=jnp.int32)
    tokens_length = jnp.array([6, 6], dtype=jnp.int32)
    phonemes = jax.random.randint(kph, (B, TP), 0, N_PHONEMES, dtype=jnp.int32)
    phonemes_length = jnp.array([8, 8], dtype=jnp.int32)
    word_token_lengths = [[2, 0, 3, 1], [1, 2, 2, 1]]
    word_phoneme_lengths = [[2, 1, 3, 2], [3, 2, 2, 1]]
    phonemes_index = jnp.array([3, 5], dtype=jnp.int32)

    meta_emb, audio_emb, loss = superclap_forward(
        params,
        audio=audio, audio_length=audio_length,
        tokens=tokens, tokens_length=tokens_length,
        phonemes=phonemes, phonemes_length=phonemes_length,
        word_token_lengths=word_token_lengths,
        word_phoneme_lengths=word_phoneme_lengths,
        phonemes_index=phonemes_index)

    jax.block_until_ready((meta_emb, audio_emb, loss))
    assert meta_emb.shape == (B, D) and audio_emb.shape == (B, D)
    assert bool(jnp.isfinite(loss))
    print("KERNEL_OK")
</pallas_src>

<mosaic_0001>
module attributes {stable_mosaic.version = 11 : i64} {
  func.func @_superclap_kernel(%arg0: memref<16x32xf32, #tpu.memory_space<vmem>>, %arg1: memref<16x32xf32, #tpu.memory_space<vmem>>, %arg2: memref<32x32xf32, #tpu.memory_space<vmem>>, %arg3: memref<16x16xf32, #tpu.memory_space<vmem>>, %arg4: memref<16x16xf32, #tpu.memory_space<vmem>>, %arg5: memref<32x32xf32, #tpu.memory_space<vmem>>, %arg6: memref<16x16xf32, #tpu.memory_space<vmem>>, %arg7: memref<2x16xf32, #tpu.memory_space<vmem>>, %arg8: memref<2x32xf32, #tpu.memory_space<vmem>>, %arg9: memref<1xf32, #tpu.memory_space<smem>>, %arg10: memref<4x5x32x32xf32, #tpu.memory_space<vmem>>, %arg11: memref<4x32x64xf32, #tpu.memory_space<vmem>>, %arg12: memref<4x64x32xf32, #tpu.memory_space<vmem>>, %arg13: memref<2x32xf32, #tpu.memory_space<vmem>>, %arg14: memref<2x32xf32, #tpu.memory_space<vmem>>, %arg15: memref<1x1xf32, #tpu.memory_space<vmem>>) attributes {dimension_semantics = [], scalar_prefetch = 0 : i64, scratch_operands = 0 : i64, tpu.core_type = #tpu.core_type<tc>} {
    %c0 = arith.constant 0 : index
    %c0_0 = arith.constant 0 : index
    %0 = vector.load %arg0[%c0, %c0_0] : memref<16x32xf32, #tpu.memory_space<vmem>>, vector<16x32xf32>
    %c0_1 = arith.constant 0 : index
    %c0_2 = arith.constant 0 : index
    %1 = vector.load %arg3[%c0_1, %c0_2] : memref<16x16xf32, #tpu.memory_space<vmem>>, vector<16x16xf32>
    %c0_3 = arith.constant 0 : index
    %c0_4 = arith.constant 0 : index
    %c0_5 = arith.constant 0 : index
    %c0_6 = arith.constant 0 : index
    %2 = vector.load %arg10[%c0_3, %c0_4, %c0_5, %c0_6] : memref<4x5x32x32xf32, #tpu.memory_space<vmem>>, vector<1x1x32x32xf32>
    %3 = vector.shape_cast %2 : vector<1x1x32x32xf32> to vector<32x32xf32>
    %c0_7 = arith.constant 0 : index
    %c1 = arith.constant 1 : index
    %c0_8 = arith.constant 0 : index
    %c0_9 = arith.constant 0 : index
    %4 = vector.load %arg10[%c0_7, %c1, %c0_8, %c0_9] : memref<4x5x32x32xf32, #tpu.memory_space<vmem>>, vector<1x1x32x32xf32>
    %5 = vector.shape_cast %4 : vector<1x1x32x32xf32> to vector<32x32xf32>
    %c0_10 = arith.constant 0 : index
    %c2 = arith.constant 2 : index
    %c0_11 = arith.constant 0 : index
    %c0_12 = arith.constant 0 : index
    %6 = vector.load %arg10[%c0_10, %c2, %c0_11, %c0_12] : memref<4x5x32x32xf32, #tpu.memory_space<vmem>>, vector<1x1x32x32xf32>
    %7 = vector.shape_cast %6 : vector<1x1x32x32xf32> to vector<32x32xf32>
    %c0_13 = arith.constant 0 : index
    %c3 = arith.constant 3 : index
    %c0_14 = arith.constant 0 : index
    %c0_15 = arith.constant 0 : index
    %8 = vector.load %arg10[%c0_13, %c3, %c0_14, %c0_15] : memref<4x5x32x32xf32, #tpu.memory_space<vmem>>, vector<1x1x32x32xf32>
    %9 = vector.shape_cast %8 : vector<1x1x32x32xf32> to vector<32x32xf32>
    %c0_16 = arith.constant 0 : index
    %c4 = arith.constant 4 : index
    %c0_17 = arith.constant 0 : index
    %c0_18 = arith.constant 0 : index
    %10 = vector.load %arg10[%c0_16, %c4, %c0_17, %c0_18] : memref<4x5x32x32xf32, #tpu.memory_space<vmem>>, vector<1x1x32x32xf32>
    %11 = vector.shape_cast %10 : vector<1x1x32x32xf32> to vector<32x32xf32>
    %c0_19 = arith.constant 0 : index
    %c0_20 = arith.constant 0 : index
    %c0_21 = arith.constant 0 : index
    %12 = vector.load %arg11[%c0_19, %c0_20, %c0_21] : memref<4x32x64xf32, #tpu.memory_space<vmem>>, vector<1x32x64xf32>
    %13 = vector.shape_cast %12 : vector<1x32x64xf32> to vector<32x64xf32>
    %c0_22 = arith.constant 0 : index
    %c0_23 = arith.constant 0 : index
    %c0_24 = arith.constant 0 : index
    %14 = vector.load %arg12[%c0_22, %c0_23, %c0_24] : memref<4x64x32xf32, #tpu.memory_space<vmem>>, vector<1x64x32xf32>
    %15 = vector.shape_cast %14 : vector<1x64x32xf32> to vector<64x32xf32>
    %cst = arith.constant dense<0.000000e+00> : vector<16x32xf32>
    %16 = tpu.matmul %0, %3, %cst {dimension_numbers = #tpu.dot_dimension_numbers<[1], [0], [0], [1], [0, 0, 1, 1], [], []>} : vector<16x32xf32>, vector<32x32xf32>, vector<16x32xf32> -> vector<16x32xf32>
    %cst_25 = arith.constant dense<0.000000e+00> : vector<16x32xf32>
    %17 = tpu.matmul %16, %5, %cst_25 {dimension_numbers = #tpu.dot_dimension_numbers<[1], [0], [0], [1], [0, 0, 1, 1], [], []>} : vector<16x32xf32>, vector<32x32xf32>, vector<16x32xf32> -> vector<16x32xf32>
    %cst_26 = arith.constant dense<0.000000e+00> : vector<16x32xf32>
    %18 = tpu.matmul %16, %7, %cst_26 {dimension_numbers = #tpu.dot_dimension_numbers<[1], [0], [0], [1], [0, 0, 1, 1], [], []>} : vector<16x32xf32>, vector<32x32xf32>, vector<16x32xf32> -> vector<16x32xf32>
    %cst_27 = arith.constant dense<0.000000e+00> : vector<16x32xf32>
    %19 = tpu.matmul %16, %9, %cst_27 {dimension_numbers = #tpu.dot_dimension_numbers<[1], [0], [0], [1], [0, 0, 1, 1], [], []>} : vector<16x32xf32>, vector<32x32xf32>, vector<16x32xf32> -> vector<16x32xf32>
    %cst_28 = arith.constant dense<0.000000e+00> : vector<16x16xf32>
    %20 = tpu.matmul %17, %18, %cst_28 {dimension_numbers = #tpu.dot_dimension_numbers<[1], [1], [0], [0], [0, 0, 1, 0], [], []>} : vector<16x32xf32>, vector<16x32xf32>, vector<16x16xf32> -> vector<16x16xf32>
    %cst_29 = arith.constant 0.176776692 : f32
    %21 = vector.broadcast %cst_29 : f32 to vector<16x16xf32>
    %22 = arith.mulf %20, %21 : vector<16x16xf32>
    %23 = arith.addf %22, %1 : vector<16x16xf32>
    %cst_30 = arith.constant dense<0xFF800000> : vector<16xf32>
    %24 = vector.multi_reduction <maximumf>, %23, %cst_30 [1] : vector<16x16xf32> to vector<16xf32>
    %25 = vector.shape_cast %24 : vector<16xf32> to vector<16x1xf32>
    %26 = vector.broadcast %25 : vector<16x1xf32> to vector<16x16xf32>
    %27 = arith.subf %23, %26 : vector<16x16xf32>
    %28 = math.exp %27 : vector<16x16xf32>
    %cst_31 = arith.constant dense<0.000000e+00> : vector<16xf32>
    %29 = vector.multi_reduction <add>, %28, %cst_31 [1] : vector<16x16xf32> to vector<16xf32>
    %30 = vector.shape_cast %29 : vector<16xf32> to vector<16x1xf32>
    %31 = vector.broadcast %30 : vector<16x1xf32> to vector<16x16xf32>
    %32 = arith.divf %28, %31 : vector<16x16xf32>
    %cst_32 = arith.constant dense<0.000000e+00> : vector<16x32xf32>
    %33 = tpu.matmul %32, %19, %cst_32 {dimension_numbers = #tpu.dot_dimension_numbers<[1], [0], [0], [1], [0, 0, 1, 1], [], []>} : vector<16x16xf32>, vector<16x32xf32>, vector<16x32xf32> -> vector<16x32xf32>
    %cst_33 = arith.constant dense<0.000000e+00> : vector<16x32xf32>
    %34 = tpu.matmul %33, %11, %cst_33 {dimension_numbers = #tpu.dot_dimension_numbers<[1], [0], [0], [1], [0, 0, 1, 1], [], []>} : vector<16x32xf32>, vector<32x32xf32>, vector<16x32xf32> -> vector<16x32xf32>
    %35 = arith.addf %16, %34 : vector<16x32xf32>
    %cst_34 = arith.constant dense<0.000000e+00> : vector<16x64xf32>
    %36 = tpu.matmul %35, %13, %cst_34 {dimension_numbers = #tpu.dot_dimension_numbers<[1], [0], [0], [1], [0, 0, 1, 1], [], []>} : vector<16x32xf32>, vector<32x64xf32>, vector<16x64xf32> -> vector<16x64xf32>
    %cst_35 = arith.constant 0.000000e+00 : f32
    %37 = vector.broadcast %cst_35 : f32 to vector<16x64xf32>
    %38 = arith.maximumf %36, %37 : vector<16x64xf32>
    %cst_36 = arith.constant dense<0.000000e+00> : vector<16x32xf32>
    %39 = tpu.matmul %38, %15, %cst_36 {dimension_numbers = #tpu.dot_dimension_numbers<[1], [0], [0], [1], [0, 0, 1, 1], [], []>} : vector<16x64xf32>, vector<64x32xf32>, vector<16x32xf32> -> vector<16x32xf32>
    %40 = arith.addf %35, %39 : vector<16x32xf32>
    %c0_37 = arith.constant 0 : index
    %c0_38 = arith.constant 0 : index
    %41 = vector.load %arg1[%c0_37, %c0_38] : memref<16x32xf32, #tpu.memory_space<vmem>>, vector<16x32xf32>
    %c0_39 = arith.constant 0 : index
    %c0_40 = arith.constant 0 : index
    %42 = vector.load %arg4[%c0_39, %c0_40] : memref<16x16xf32, #tpu.memory_space<vmem>>, vector<16x16xf32>
    %c1_41 = arith.constant 1 : index
    %c0_42 = arith.constant 0 : index
    %c0_43 = arith.constant 0 : index
    %c0_44 = arith.constant 0 : index
    %43 = vector.load %arg10[%c1_41, %c0_42, %c0_43, %c0_44] : memref<4x5x32x32xf32, #tpu.memory_space<vmem>>, vector<1x1x32x32xf32>
    %44 = vector.shape_cast %43 : vector<1x1x32x32xf32> to vector<32x32xf32>
    %c1_45 = arith.constant 1 : index
    %c1_46 = arith.constant 1 : index
    %c0_47 = arith.constant 0 : index
    %c0_48 = arith.constant 0 : index
    %45 = vector.load %arg10[%c1_45, %c1_46, %c0_47, %c0_48] : memref<4x5x32x32xf32, #tpu.memory_space<vmem>>, vector<1x1x32x32xf32>
    %46 = vector.shape_cast %45 : vector<1x1x32x32xf32> to vector<32x32xf32>
    %c1_49 = arith.constant 1 : index
    %c2_50 = arith.constant 2 : index
    %c0_51 = arith.constant 0 : index
    %c0_52 = arith.constant 0 : index
    %47 = vector.load %arg10[%c1_49, %c2_50, %c0_51, %c0_52] : memref<4x5x32x32xf32, #tpu.memory_space<vmem>>, vector<1x1x32x32xf32>
    %48 = vector.shape_cast %47 : vector<1x1x32x32xf32> to vector<32x32xf32>
    %c1_53 = arith.constant 1 : index
    %c3_54 = arith.constant 3 : index
    %c0_55 = arith.constant 0 : index
    %c0_56 = arith.constant 0 : index
    %49 = vector.load %arg10[%c1_53, %c3_54, %c0_55, %c0_56] : memref<4x5x32x32xf32, #tpu.memory_space<vmem>>, vector<1x1x32x32xf32>
    %50 = vector.shape_cast %49 : vector<1x1x32x32xf32> to vector<32x32xf32>
    %c1_57 = arith.constant 1 : index
    %c4_58 = arith.constant 4 : index
    %c0_59 = arith.constant 0 : index
    %c0_60 = arith.constant 0 : index
    %51 = vector.load %arg10[%c1_57, %c4_58, %c0_59, %c0_60] : memref<4x5x32x32xf32, #tpu.memory_space<vmem>>, vector<1x1x32x32xf32>
    %52 = vector.shape_cast %51 : vector<1x1x32x32xf32> to vector<32x32xf32>
    %c1_61 = arith.constant 1 : index
    %c0_62 = arith.constant 0 : index
    %c0_63 = arith.constant 0 : index
    %53 = vector.load %arg11[%c1_61, %c0_62, %c0_63] : memref<4x32x64xf32, #tpu.memory_space<vmem>>, vector<1x32x64xf32>
    %54 = vector.shape_cast %53 : vector<1x32x64xf32> to vector<32x64xf32>
    %c1_64 = arith.constant 1 : index
    %c0_65 = arith.constant 0 : index
    %c0_66 = arith.constant 0 : index
    %55 = vector.load %arg12[%c1_64, %c0_65, %c0_66] : memref<4x64x32xf32, #tpu.memory_space<vmem>>, vector<1x64x32xf32>
    %56 = vector.shape_cast %55 : vector<1x64x32xf32> to vector<64x32xf32>
    %cst_67 = arith.constant dense<0.000000e+00> : vector<16x32xf32>
    %57 = tpu.matmul %41, %44, %cst_67 {dimension_numbers = #tpu.dot_dimension_numbers<[1], [0], [0], [1], [0, 0, 1, 1], [], []>} : vector<16x32xf32>, vector<32x32xf32>, vector<16x32xf32> -> vector<16x32xf32>
    %cst_68 = arith.constant dense<0.000000e+00> : vector<16x32xf32>
    %58 = tpu.matmul %57, %46, %cst_68 {dimension_numbers = #tpu.dot_dimension_numbers<[1], [0], [0], [1], [0, 0, 1, 1], [], []>} : vector<16x32xf32>, vector<32x32xf32>, vector<16x32xf32> -> vector<16x32xf32>
    %cst_69 = arith.constant dense<0.000000e+00> : vector<16x32xf32>
    %59 = tpu.matmul %57, %48, %cst_69 {dimension_numbers = #tpu.dot_dimension_numbers<[1], [0], [0], [1], [0, 0, 1, 1], [], []>} : vector<16x32xf32>, vector<32x32xf32>, vector<16x32xf32> -> vector<16x32xf32>
    %cst_70 = arith.constant dense<0.000000e+00> : vector<16x32xf32>
    %60 = tpu.matmul %57, %50, %cst_70 {dimension_numbers = #tpu.dot_dimension_numbers<[1], [0], [0], [1], [0, 0, 1, 1], [], []>} : vector<16x32xf32>, vector<32x32xf32>, vector<16x32xf32> -> vector<16x32xf32>
    %cst_71 = arith.constant dense<0.000000e+00> : vector<16x16xf32>
    %61 = tpu.matmul %58, %59, %cst_71 {dimension_numbers = #tpu.dot_dimension_numbers<[1], [1], [0], [0], [0, 0, 1, 0], [], []>} : vector<16x32xf32>, vector<16x32xf32>, vector<16x16xf32> -> vector<16x16xf32>
    %cst_72 = arith.constant 0.176776692 : f32
    %62 = vector.broadcast %cst_72 : f32 to vector<16x16xf32>
    %63 = arith.mulf %61, %62 : vector<16x16xf32>
    %64 = arith.addf %63, %42 : vector<16x16xf32>
    %cst_73 = arith.constant dense<0xFF800000> : vector<16xf32>
    %65 = vector.multi_reduction <maximumf>, %64, %cst_73 [1] : vector<16x16xf32> to vector<16xf32>
    %66 = vector.shape_cast %65 : vector<16xf32> to vector<16x1xf32>
    %67 = vector.broadcast %66 : vector<16x1xf32> to vector<16x16xf32>
    %68 = arith.subf %64, %67 : vector<16x16xf32>
    %69 = math.exp %68 : vector<16x16xf32>
    %cst_74 = arith.constant dense<0.000000e+00> : vector<16xf32>
    %70 = vector.multi_reduction <add>, %69, %cst_74 [1] : vector<16x16xf32> to vector<16xf32>
    %71 = vector.shape_cast %70 : vector<16xf32> to vector<16x1xf32>
    %72 = vector.broadcast %71 : vector<16x1xf32> to vector<16x16xf32>
    %73 = arith.divf %69, %72 : vector<16x16xf32>
    %cst_75 = arith.constant dense<0.000000e+00> : vector<16x32xf32>
    %74 = tpu.matmul %73, %60, %cst_75 {dimension_numbers = #tpu.dot_dimension_numbers<[1], [0], [0], [1], [0, 0, 1, 1], [], []>} : vector<16x16xf32>, vector<16x32xf32>, vector<16x32xf32> -> vector<16x32xf32>
    %cst_76 = arith.constant dense<0.000000e+00> : vector<16x32xf32>
    %75 = tpu.matmul %74, %52, %cst_76 {dimension_numbers = #tpu.dot_dimension_numbers<[1], [0], [0], [1], [0, 0, 1, 1], [], []>} : vector<16x32xf32>, vector<32x32xf32>, vector<16x32xf32> -> vector<16x32xf32>
    %76 = arith.addf %57, %75 : vector<16x32xf32>
    %cst_77 = arith.constant dense<0.000000e+00> : vector<16x64xf32>
    %77 = tpu.matmul %76, %54, %cst_77 {dimension_numbers = #tpu.dot_dimension_numbers<[1], [0], [0], [1], [0, 0, 1, 1], [], []>} : vector<16x32xf32>, vector<32x64xf32>, vector<16x64xf32> -> vector<16x64xf32>
    %cst_78 = arith.constant 0.000000e+00 : f32
    %78 = vector.broadcast %cst_78 : f32 to vector<16x64xf32>
    %79 = arith.maximumf %77, %78 : vector<16x64xf32>
    %cst_79 = arith.constant dense<0.000000e+00> : vector<16x32xf32>
    %80 = tpu.matmul %79, %56, %cst_79 {dimension_numbers = #tpu.dot_dimension_numbers<[1], [0], [0], [1], [0, 0, 1, 1], [], []>} : vector<16x64xf32>, vector<64x32xf32>, vector<16x32xf32> -> vector<16x32xf32>
    %81 = arith.addf %76, %80 : vector<16x32xf32>
    %c0_80 = arith.constant 0 : index
    %c0_81 = arith.constant 0 : index
    %82 = vector.load %arg6[%c0_80, %c0_81] : memref<16x16xf32, #tpu.memory_space<vmem>>, vector<16x16xf32>
    %cst_82 = arith.constant dense<0.000000e+00> : vector<16x32xf32>
    %83 = tpu.matmul %82, %40, %cst_82 {dimension_numbers = #tpu.dot_dimension_numbers<[1], [0], [0], [1], [0, 0, 1, 1], [], []>} : vector<16x16xf32>, vector<16x32xf32>, vector<16x32xf32> -> vector<16x32xf32>
    %84 = arith.addf %81, %83 : vector<16x32xf32>
    %c0_83 = arith.constant 0 : index
    %c0_84 = arith.constant 0 : index
    %85 = vector.load %arg4[%c0_83, %c0_84] : memref<16x16xf32, #tpu.memory_space<vmem>>, vector<16x16xf32>
    %c2_85 = arith.constant 2 : index
    %c0_86 = arith.constant 0 : index
    %c0_87 = arith.constant 0 : index
    %c0_88 = arith.constant 0 : index
    %86 = vector.load %arg10[%c2_85, %c0_86, %c0_87, %c0_88] : memref<4x5x32x32xf32, #tpu.memory_space<vmem>>, vector<1x1x32x32xf32>
    %87 = vector.shape_cast %86 : vector<1x1x32x32xf32> to vector<32x32xf32>
    %c2_89 = arith.constant 2 : index
    %c1_90 = arith.constant 1 : index
    %c0_91 = arith.constant 0 : index
    %c0_92 = arith.constant 0 : index
    %88 = vector.load %arg10[%c2_89, %c1_90, %c0_91, %c0_92] : memref<4x5x32x32xf32, #tpu.memory_space<vmem>>, vector<1x1x32x32xf32>
    %89 = vector.shape_cast %88 : vector<1x1x32x32xf32> to vector<32x32xf32>
    %c2_93 = arith.constant 2 : index
    %c2_94 = arith.constant 2 : index
    %c0_95 = arith.constant 0 : index
    %c0_96 = arith.constant 0 : index
    %90 = vector.load %arg10[%c2_93, %c2_94, %c0_95, %c0_96] : memref<4x5x32x32xf32, #tpu.memory_space<vmem>>, vector<1x1x32x32xf32>
    %91 = vector.shape_cast %90 : vector<1x1x32x32xf32> to vector<32x32xf32>
    %c2_97 = arith.constant 2 : index
    %c3_98 = arith.constant 3 : index
    %c0_99 = arith.constant 0 : index
    %c0_100 = arith.constant 0 : index
    %92 = vector.load %arg10[%c2_97, %c3_98, %c0_99, %c0_100] : memref<4x5x32x32xf32, #tpu.memory_space<vmem>>, vector<1x1x32x32xf32>
    %93 = vector.shape_cast %92 : vector<1x1x32x32xf32> to vector<32x32xf32>
    %c2_101 = arith.constant 2 : index
    %c4_102 = arith.constant 4 : index
    %c0_103 = arith.constant 0 : index
    %c0_104 = arith.constant 0 : index
    %94 = vector.load %arg10[%c2_101, %c4_102, %c0_103, %c0_104] : memref<4x5x32x32xf32, #tpu.memory_space<vmem>>, vector<1x1x32x32xf32>
    %95 = vector.shape_cast %94 : vector<1x1x32x32xf32> to vector<32x32xf32>
    %c2_105 = arith.constant 2 : index
    %c0_106 = arith.constant 0 : index
    %c0_107 = arith.constant 0 : index
    %96 = vector.load %arg11[%c2_105, %c0_106, %c0_107] : memref<4x32x64xf32, #tpu.memory_space<vmem>>, vector<1x32x64xf32>
    %97 = vector.shape_cast %96 : vector<1x32x64xf32> to vector<32x64xf32>
    %c2_108 = arith.constant 2 : index
    %c0_109 = arith.constant 0 : index
    %c0_110 = arith.constant 0 : index
    %98 = vector.load %arg12[%c2_108, %c0_109, %c0_110] : memref<4x64x32xf32, #tpu.memory_space<vmem>>, vector<1x64x32xf32>
    %99 = vector.shape_cast %98 : vector<1x64x32xf32> to vector<64x32xf32>
    %cst_111 = arith.constant dense<0.000000e+00> : vector<16x32xf32>
    %100 = tpu.matmul %84, %87, %cst_111 {dimension_numbers = #tpu.dot_dimension_numbers<[1], [0], [0], [1], [0, 0, 1, 1], [], []>} : vector<16x32xf32>, vector<32x32xf32>, vector<16x32xf32> -> vector<16x32xf32>
    %cst_112 = arith.constant dense<0.000000e+00> : vector<16x32xf32>
    %101 = tpu.matmul %100, %89, %cst_112 {dimension_numbers = #tpu.dot_dimension_numbers<[1], [0], [0], [1], [0, 0, 1, 1], [], []>} : vector<16x32xf32>, vector<32x32xf32>, vector<16x32xf32> -> vector<16x32xf32>
    %cst_113 = arith.constant dense<0.000000e+00> : vector<16x32xf32>
    %102 = tpu.matmul %100, %91, %cst_113 {dimension_numbers = #tpu.dot_dimension_numbers<[1], [0], [0], [1], [0, 0, 1, 1], [], []>} : vector<16x32xf32>, vector<32x32xf32>, vector<16x32xf32> -> vector<16x32xf32>
    %cst_114 = arith.constant dense<0.000000e+00> : vector<16x32xf32>
    %103 = tpu.matmul %100, %93, %cst_114 {dimension_numbers = #tpu.dot_dimension_numbers<[1], [0], [0], [1], [0, 0, 1, 1], [], []>} : vector<16x32xf32>, vector<32x32xf32>, vector<16x32xf32> -> vector<16x32xf32>
    %cst_115 = arith.constant dense<0.000000e+00> : vector<16x16xf32>
    %104 = tpu.matmul %101, %102, %cst_115 {dimension_numbers = #tpu.dot_dimension_numbers<[1], [1], [0], [0], [0, 0, 1, 0], [], []>} : vector<16x32xf32>, vector<16x32xf32>, vector<16x16xf32> -> vector<16x16xf32>
    %cst_116 = arith.constant 0.176776692 : f32
    %105 = vector.broadcast %cst_116 : f32 to vector<16x16xf32>
    %106 = arith.mulf %104, %105 : vector<16x16xf32>
    %107 = arith.addf %106, %85 : vector<16x16xf32>
    %cst_117 = arith.constant dense<0xFF800000> : vector<16xf32>
    %108 = vector.multi_reduction <maximumf>, %107, %cst_117 [1] : vector<16x16xf32> to vector<16xf32>
    %109 = vector.shape_cast %108 : vector<16xf32> to vector<16x1xf32>
    %110 = vector.broadcast %109 : vector<16x1xf32> to vector<16x16xf32>
    %111 = arith.subf %107, %110 : vector<16x16xf32>
    %112 = math.exp %111 : vector<16x16xf32>
    %cst_118 = arith.constant dense<0.000000e+00> : vector<16xf32>
    %113 = vector.multi_reduction <add>, %112, %cst_118 [1] : vector<16x16xf32> to vector<16xf32>
    %114 = vector.shape_cast %113 : vector<16xf32> to vector<16x1xf32>
    %115 = vector.broadcast %114 : vector<16x1xf32> to vector<16x16xf32>
    %116 = arith.divf %112, %115 : vector<16x16xf32>
    %cst_119 = arith.constant dense<0.000000e+00> : vector<16x32xf32>
    %117 = tpu.matmul %116, %103, %cst_119 {dimension_numbers = #tpu.dot_dimension_numbers<[1], [0], [0], [1], [0, 0, 1, 1], [], []>} : vector<16x16xf32>, vector<16x32xf32>, vector<16x32xf32> -> vector<16x32xf32>
    %cst_120 = arith.constant dense<0.000000e+00> : vector<16x32xf32>
    %118 = tpu.matmul %117, %95, %cst_120 {dimension_numbers = #tpu.dot_dimension_numbers<[1], [0], [0], [1], [0, 0, 1, 1], [], []>} : vector<16x32xf32>, vector<32x32xf32>, vector<16x32xf32> -> vector<16x32xf32>
    %119 = arith.addf %100, %118 : vector<16x32xf32>
    %cst_121 = arith.constant dense<0.000000e+00> : vector<16x64xf32>
    %120 = tpu.matmul %119, %97, %cst_121 {dimension_numbers = #tpu.dot_dimension_numbers<[1], [0], [0], [1], [0, 0, 1, 1], [], []>} : vector<16x32xf32>, vector<32x64xf32>, vector<16x64xf32> -> vector<16x64xf32>
    %cst_122 = arith.constant 0.000000e+00 : f32
    %121 = vector.broadcast %cst_122 : f32 to vector<16x64xf32>
    %122 = arith.maximumf %120, %121 : vector<16x64xf32>
    %cst_123 = arith.constant dense<0.000000e+00> : vector<16x32xf32>
    %123 = tpu.matmul %122, %99, %cst_123 {dimension_numbers = #tpu.dot_dimension_numbers<[1], [0], [0], [1], [0, 0, 1, 1], [], []>} : vector<16x64xf32>, vector<64x32xf32>, vector<16x32xf32> -> vector<16x32xf32>
    %124 = arith.addf %119, %123 : vector<16x32xf32>
    %c0_124 = arith.constant 0 : index
    %c0_125 = arith.constant 0 : index
    %125 = vector.load %arg2[%c0_124, %c0_125] : memref<32x32xf32, #tpu.memory_space<vmem>>, vector<32x32xf32>
    %c0_126 = arith.constant 0 : index
    %c0_127 = arith.constant 0 : index
    %126 = vector.load %arg5[%c0_126, %c0_127] : memref<32x32xf32, #tpu.memory_space<vmem>>, vector<32x32xf32>
    %c3_128 = arith.constant 3 : index
    %c0_129 = arith.constant 0 : index
    %c0_130 = arith.constant 0 : index
    %c0_131 = arith.constant 0 : index
    %127 = vector.load %arg10[%c3_128, %c0_129, %c0_130, %c0_131] : memref<4x5x32x32xf32, #tpu.memory_space<vmem>>, vector<1x1x32x32xf32>
    %128 = vector.shape_cast %127 : vector<1x1x32x32xf32> to vector<32x32xf32>
    %c3_132 = arith.constant 3 : index
    %c1_133 = arith.constant 1 : index
    %c0_134 = arith.constant 0 : index
    %c0_135 = arith.constant 0 : index
    %129 = vector.load %arg10[%c3_132, %c1_133, %c0_134, %c0_135] : memref<4x5x32x32xf32, #tpu.memory_space<vmem>>, vector<1x1x32x32xf32>
    %130 = vector.shape_cast %129 : vector<1x1x32x32xf32> to vector<32x32xf32>
    %c3_136 = arith.constant 3 : index
    %c2_137 = arith.constant 2 : index
    %c0_138 = arith.constant 0 : index
    %c0_139 = arith.constant 0 : index
    %131 = vector.load %arg10[%c3_136, %c2_137, %c0_138, %c0_139] : memref<4x5x32x32xf32, #tpu.memory_space<vmem>>, vector<1x1x32x32xf32>
    %132 = vector.shape_cast %131 : vector<1x1x32x32xf32> to vector<32x32xf32>
    %c3_140 = arith.constant 3 : index
    %c3_141 = arith.constant 3 : index
    %c0_142 = arith.constant 0 : index
    %c0_143 = arith.constant 0 : index
    %133 = vector.load %arg10[%c3_140, %c3_141, %c0_142, %c0_143] : memref<4x5x32x32xf32, #tpu.memory_space<vmem>>, vector<1x1x32x32xf32>
    %134 = vector.shape_cast %133 : vector<1x1x32x32xf32> to vector<32x32xf32>
    %c3_144 = arith.constant 3 : index
    %c4_145 = arith.constant 4 : index
    %c0_146 = arith.constant 0 : index
    %c0_147 = arith.constant 0 : index
    %135 = vector.load %arg10[%c3_144, %c4_145, %c0_146, %c0_147] : memref<4x5x32x32xf32, #tpu.memory_space<vmem>>, vector<1x1x32x32xf32>
    %136 = vector.shape_cast %135 : vector<1x1x32x32xf32> to vector<32x32xf32>
    %c3_148 = arith.constant 3 : index
    %c0_149 = arith.constant 0 : index
    %c0_150 = arith.constant 0 : index
    %137 = vector.load %arg11[%c3_148, %c0_149, %c0_150] : memref<4x32x64xf32, #tpu.memory_space<vmem>>, vector<1x32x64xf32>
    %138 = vector.shape_cast %137 : vector<1x32x64xf32> to vector<32x64xf32>
    %c3_151 = arith.constant 3 : index
    %c0_152 = arith.constant 0 : index
    %c0_153 = arith.constant 0 : index
    %139 = vector.load %arg12[%c3_151, %c0_152, %c0_153] : memref<4x64x32xf32, #tpu.memory_space<vmem>>, vector<1x64x32xf32>
    %140 = vector.shape_cast %139 : vector<1x64x32xf32> to vector<64x32xf32>
    %cst_154 = arith.constant dense<0.000000e+00> : vector<32x32xf32>
    %141 = tpu.matmul %125, %128, %cst_154 {dimension_numbers = #tpu.dot_dimension_numbers<[1], [0], [0], [1], [0, 0, 1, 1], [], []>} : vector<32x32xf32>, vector<32x32xf32>, vector<32x32xf32> -> vector<32x32xf32>
    %cst_155 = arith.constant dense<0.000000e+00> : vector<32x32xf32>
    %142 = tpu.matmul %141, %130, %cst_155 {dimension_numbers = #tpu.dot_dimension_numbers<[1], [0], [0], [1], [0, 0, 1, 1], [], []>} : vector<32x32xf32>, vector<32x32xf32>, vector<32x32xf32> -> vector<32x32xf32>
    %cst_156 = arith.constant dense<0.000000e+00> : vector<32x32xf32>
    %143 = tpu.matmul %141, %132, %cst_156 {dimension_numbers = #tpu.dot_dimension_numbers<[1], [0], [0], [1], [0, 0, 1, 1], [], []>} : vector<32x32xf32>, vector<32x32xf32>, vector<32x32xf32> -> vector<32x32xf32>
    %cst_157 = arith.constant dense<0.000000e+00> : vector<32x32xf32>
    %144 = tpu.matmul %141, %134, %cst_157 {dimension_numbers = #tpu.dot_dimension_numbers<[1], [0], [0], [1], [0, 0, 1, 1], [], []>} : vector<32x32xf32>, vector<32x32xf32>, vector<32x32xf32> -> vector<32x32xf32>
    %cst_158 = arith.constant dense<0.000000e+00> : vector<32x32xf32>
    %145 = tpu.matmul %142, %143, %cst_158 {dimension_numbers = #tpu.dot_dimension_numbers<[1], [1], [0], [0], [0, 0, 1, 0], [], []>} : vector<32x32xf32>, vector<32x32xf32>, vector<32x32xf32> -> vector<32x32xf32>
    %cst_159 = arith.constant 0.176776692 : f32
    %146 = vector.broadcast %cst_159 : f32 to vector<32x32xf32>
    %147 = arith.mulf %145, %146 : vector<32x32xf32>
    %148 = arith.addf %147, %126 : vector<32x32xf32>
    %cst_160 = arith.constant dense<0xFF800000> : vector<32xf32>
    %149 = vector.multi_reduction <maximumf>, %148, %cst_160 [1] : vector<32x32xf32> to vector<32xf32>
    %150 = vector.shape_cast %149 : vector<32xf32> to vector<32x1xf32>
    %151 = vector.broadcast %150 : vector<32x1xf32> to vector<32x32xf32>
    %152 = arith.subf %148, %151 : vector<32x32xf32>
    %153 = math.exp %152 : vector<32x32xf32>
    %cst_161 = arith.constant dense<0.000000e+00> : vector<32xf32>
    %154 = vector.multi_reduction <add>, %153, %cst_161 [1] : vector<32x32xf32> to vector<32xf32>
    %155 = vector.shape_cast %154 : vector<32xf32> to vector<32x1xf32>
    %156 = vector.broadcast %155 : vector<32x1xf32> to vector<32x32xf32>
    %157 = arith.divf %153, %156 : vector<32x32xf32>
    %cst_162 = arith.constant dense<0.000000e+00> : vector<32x32xf32>
    %158 = tpu.matmul %157, %144, %cst_162 {dimension_numbers = #tpu.dot_dimension_numbers<[1], [0], [0], [1], [0, 0, 1, 1], [], []>} : vector<32x32xf32>, vector<32x32xf32>, vector<32x32xf32> -> vector<32x32xf32>
    %cst_163 = arith.constant dense<0.000000e+00> : vector<32x32xf32>
    %159 = tpu.matmul %158, %136, %cst_163 {dimension_numbers = #tpu.dot_dimension_numbers<[1], [0], [0], [1], [0, 0, 1, 1], [], []>} : vector<32x32xf32>, vector<32x32xf32>, vector<32x32xf32> -> vector<32x32xf32>
    %160 = arith.addf %141, %159 : vector<32x32xf32>
    %cst_164 = arith.constant dense<0.000000e+00> : vector<32x64xf32>
    %161 = tpu.matmul %160, %138, %cst_164 {dimension_numbers = #tpu.dot_dimension_numbers<[1], [0], [0], [1], [0, 0, 1, 1], [], []>} : vector<32x32xf32>, vector<32x64xf32>, vector<32x64xf32> -> vector<32x64xf32>
    %cst_165 = arith.constant 0.000000e+00 : f32
    %162 = vector.broadcast %cst_165 : f32 to vector<32x64xf32>
    %163 = arith.maximumf %161, %162 : vector<32x64xf32>
    %cst_166 = arith.constant dense<0.000000e+00> : vector<32x32xf32>
    %164 = tpu.matmul %163, %140, %cst_166 {dimension_numbers = #tpu.dot_dimension_numbers<[1], [0], [0], [1], [0, 0, 1, 1], [], []>} : vector<32x64xf32>, vector<64x32xf32>, vector<32x32xf32> -> vector<32x32xf32>
    %165 = arith.addf %160, %164 : vector<32x32xf32>
    %c0_167 = arith.constant 0 : index
    %c0_168 = arith.constant 0 : index
    %166 = vector.load %arg8[%c0_167, %c0_168] : memref<2x32xf32, #tpu.memory_space<vmem>>, vector<2x32xf32>
    %cst_169 = arith.constant dense<0.000000e+00> : vector<2x32xf32>
    %167 = tpu.matmul %166, %165, %cst_169 {dimension_numbers = #tpu.dot_dimension_numbers<[1], [0], [0], [1], [0, 0, 1, 1], [], []>} : vector<2x32xf32>, vector<32x32xf32>, vector<2x32xf32> -> vector<2x32xf32>
    %c0_170 = arith.constant 0 : index
    %c0_171 = arith.constant 0 : index
    %168 = vector.load %arg7[%c0_170, %c0_171] : memref<2x16xf32, #tpu.memory_space<vmem>>, vector<2x16xf32>
    %cst_172 = arith.constant dense<0.000000e+00> : vector<2x32xf32>
    %169 = tpu.matmul %168, %124, %cst_172 {dimension_numbers = #tpu.dot_dimension_numbers<[1], [0], [0], [1], [0, 0, 1, 1], [], []>} : vector<2x16xf32>, vector<16x32xf32>, vector<2x32xf32> -> vector<2x32xf32>
    %170 = arith.mulf %167, %167 : vector<2x32xf32>
    %cst_173 = arith.constant dense<0.000000e+00> : vector<2xf32>
    %171 = vector.multi_reduction <add>, %170, %cst_173 [1] : vector<2x32xf32> to vector<2xf32>
    %172 = vector.shape_cast %171 : vector<2xf32> to vector<2x1xf32>
    %173 = math.sqrt %172 : vector<2x1xf32>
    %cst_174 = arith.constant 9.99999996E-13 : f32
    %174 = vector.broadcast %cst_174 : f32 to vector<2x1xf32>
    %175 = arith.maximumf %173, %174 : vector<2x1xf32>
    %176 = vector.broadcast %175 : vector<2x1xf32> to vector<2x32xf32>
    %177 = arith.divf %167, %176 : vector<2x32xf32>
    %178 = arith.mulf %169, %169 : vector<2x32xf32>
    %cst_175 = arith.constant dense<0.000000e+00> : vector<2xf32>
    %179 = vector.multi_reduction <add>, %178, %cst_175 [1] : vector<2x32xf32> to vector<2xf32>
    %180 = vector.shape_cast %179 : vector<2xf32> to vector<2x1xf32>
    %181 = math.sqrt %180 : vector<2x1xf32>
    %cst_176 = arith.constant 9.99999996E-13 : f32
    %182 = vector.broadcast %cst_176 : f32 to vector<2x1xf32>
    %183 = arith.maximumf %181, %182 : vector<2x1xf32>
    %184 = vector.broadcast %183 : vector<2x1xf32> to vector<2x32xf32>
    %185 = arith.divf %169, %184 : vector<2x32xf32>
    %c0_177 = arith.constant 0 : index
    %c0_178 = arith.constant 0 : index
    %186 = vector.load %arg13[%c0_177, %c0_178] : memref<2x32xf32, #tpu.memory_space<vmem>>, vector<2x32xf32>
    tpu.vector_store %arg13[%c0_177, %c0_178], %185 {strides = array<i32>} : memref<2x32xf32, #tpu.memory_space<vmem>>, vector<2x32xf32>,
    %c0_179 = arith.constant 0 : index
    %c0_180 = arith.constant 0 : index
    %187 = vector.load %arg14[%c0_179, %c0_180] : memref<2x32xf32, #tpu.memory_space<vmem>>, vector<2x32xf32>
    tpu.vector_store %arg14[%c0_179, %c0_180], %177 {strides = array<i32>} : memref<2x32xf32, #tpu.memory_space<vmem>>, vector<2x32xf32>,
    %c0_181 = arith.constant 0 : index
    %188 = memref.load %arg9[%c0_181] : memref<1xf32, #tpu.memory_space<smem>>
    %cst_182 = arith.constant dense<0.000000e+00> : vector<2x2xf32>
    %189 = tpu.matmul %177, %185, %cst_182 {dimension_numbers = #tpu.dot_dimension_numbers<[1], [1], [0], [0], [0, 0, 1, 0], [], []>} : vector<2x32xf32>, vector<2x32xf32>, vector<2x2xf32> -> vector<2x2xf32>
    %190 = vector.broadcast %188 : f32 to vector<2x2xf32>
    %191 = arith.mulf %190, %189 : vector<2x2xf32>
    %192 = tpu.iota {dimensions = array<i32: 0>} : vector<2x2xi32>
    %193 = tpu.iota {dimensions = array<i32: 1>} : vector<2x2xi32>
    %194 = arith.cmpi eq, %192, %193 : vector<2x2xi32>
    %195 = arith.extui %194 : vector<2x2xi1> to vector<2x2xi32>
    %196 = arith.sitofp %195 : vector<2x2xi32> to vector<2x2xf32>
    %197 = arith.mulf %191, %196 : vector<2x2xf32>
    %cst_183 = arith.constant dense<0.000000e+00> : vector<2xf32>
    %198 = vector.multi_reduction <add>, %197, %cst_183 [1] : vector<2x2xf32> to vector<2xf32>
    %199 = vector.shape_cast %198 : vector<2xf32> to vector<2x1xf32>
    %cst_184 = arith.constant dense<0xFF800000> : vector<2xf32>
    %200 = vector.multi_reduction <maximumf>, %191, %cst_184 [1] : vector<2x2xf32> to vector<2xf32>
    %201 = vector.shape_cast %200 : vector<2xf32> to vector<2x1xf32>
    %202 = vector.broadcast %201 : vector<2x1xf32> to vector<2x2xf32>
    %203 = arith.subf %191, %202 : vector<2x2xf32>
    %204 = math.exp %203 : vector<2x2xf32>
    %cst_185 = arith.constant dense<0.000000e+00> : vector<2xf32>
    %205 = vector.multi_reduction <add>, %204, %cst_185 [1] : vector<2x2xf32> to vector<2xf32>
    %206 = vector.shape_cast %205 : vector<2xf32> to vector<2x1xf32>
    %207 = math.log %206 : vector<2x1xf32>
    %208 = arith.addf %201, %207 : vector<2x1xf32>
    %209 = arith.subf %208, %199 : vector<2x1xf32>
    %210 = arith.mulf %191, %196 : vector<2x2xf32>
    %cst_186 = arith.constant dense<0.000000e+00> : vector<2xf32>
    %211 = vector.multi_reduction <add>, %210, %cst_186 [0] : vector<2x2xf32> to vector<2xf32>
    %212 = vector.shape_cast %211 : vector<2xf32> to vector<1x2xf32>
    %cst_187 = arith.constant dense<0xFF800000> : vector<2xf32>
    %213 = vector.multi_reduction <maximumf>, %191, %cst_187 [0] : vector<2x2xf32> to vector<2xf32>
    %214 = vector.shape_cast %213 : vector<2xf32> to vector<1x2xf32>
    %215 = vector.broadcast %214 : vector<1x2xf32> to vector<2x2xf32>
    %216 = arith.subf %191, %215 : vector<2x2xf32>
    %217 = math.exp %216 : vector<2x2xf32>
    %cst_188 = arith.constant dense<0.000000e+00> : vector<2xf32>
    %218 = vector.multi_reduction <add>, %217, %cst_188 [0] : vector<2x2xf32> to vector<2xf32>
    %219 = vector.shape_cast %218 : vector<2xf32> to vector<1x2xf32>
    %220 = math.log %219 : vector<1x2xf32>
    %221 = arith.addf %214, %220 : vector<1x2xf32>
    %222 = arith.subf %221, %212 : vector<1x2xf32>
    %223 = vector.shape_cast %209 : vector<2x1xf32> to vector<1x2x1xf32>
    %cst_189 = arith.constant dense<0.000000e+00> : vector<1xf32>
    %224 = vector.multi_reduction <add>, %223, %cst_189 [1, 2] : vector<1x2x1xf32> to vector<1xf32>
    %225 = vector.shape_cast %224 : vector<1xf32> to vector<1x1x1xf32>
    %226 = vector.extract %225[0, 0, 0] : f32 from vector<1x1x1xf32>
    %227 = vector.broadcast %226 : f32 to vector<1x1xf32>
    %228 = vector.shape_cast %222 : vector<1x2xf32> to vector<1x1x2xf32>
    %cst_190 = arith.constant dense<0.000000e+00> : vector<1xf32>
    %229 = vector.multi_reduction <add>, %228, %cst_190 [1, 2] : vector<1x1x2xf32> to vector<1xf32>
    %230 = vector.shape_cast %229 : vector<1xf32> to vector<1x1x1xf32>
    %231 = vector.extract %230[0, 0, 0] : f32 from vector<1x1x1xf32>
    %232 = vector.broadcast %231 : f32 to vector<1x1xf32>
    %233 = arith.addf %227, %232 : vector<1x1xf32>
    %cst_191 = arith.constant 2.000000e+00 : f32
    %cst_192 = arith.constant 2.000000e+00 : f32
    %234 = arith.mulf %cst_191, %cst_192 : f32
    %235 = vector.broadcast %234 : f32 to vector<1x1xf32>
    %236 = arith.divf %233, %235 : vector<1x1xf32>
    %c0_193 = arith.constant 0 : index
    %c0_194 = arith.constant 0 : index
    %237 = vector.load %arg15[%c0_193, %c0_194] : memref<1x1xf32, #tpu.memory_space<vmem>>, vector<1x1xf32>
    tpu.vector_store %arg15[%c0_193, %c0_194], %236 {strides = array<i32>} : memref<1x1xf32, #tpu.memory_space<vmem>>, vector<1x1xf32>,
    return
  }
}

</mosaic_0001>

<llo_original>
// kernel: _forward_core.1
$region0: #{_forward_core.1}
  #allocation0 [shape = 'u32[]', space=smem, size = 0x4, offset = 0x4, fixed_abs, tag = 'smem constant byte address 0x4 - core index']
  #allocation1 [shape = 'u32[72,128]{1,0:T(1,128)}', space=vmem, size = 0x9000, scoped, tag = 'internal scratch']
  #allocation2 [shape = 'f32[1]{0:T(128)S(6)}', space=smem, size = 0x200, scoped, tag = 'scoped memory for _forward_core.1']
  %s0 = inlined_call_operand.vmem [shape: f32[16,32], index: 0, kind: input, shape index: {}]
  %s1 = inlined_call_operand.vmem [shape: f32[16,32], index: 1, kind: input, shape index: {}]
  %s2 = inlined_call_operand.vmem [shape: f32[32,32], index: 2, kind: input, shape index: {}]
  %s3 = inlined_call_operand.vmem [shape: f32[16,16], index: 3, kind: input, shape index: {}]
  %s4 = inlined_call_operand.vmem [shape: f32[16,16], index: 4, kind: input, shape index: {}]
  %s5 = inlined_call_operand.vmem [shape: f32[32,32], index: 5, kind: input, shape index: {}]
  %s6 = inlined_call_operand.vmem [shape: f32[16,16], index: 6, kind: input, shape index: {}]
  %s7 = inlined_call_operand.vmem [shape: f32[2,16], index: 7, kind: input, shape index: {}]
  %s8 = inlined_call_operand.vmem [shape: f32[2,32], index: 8, kind: input, shape index: {}]
  %s9 = inlined_call_operand.<no memory space> [shape: f32[1], index: 9, kind: input, shape index: {}]
  %s10 = inlined_call_operand.vmem [shape: f32[4,5,32,32], index: 10, kind: input, shape index: {}]
  %s11 = inlined_call_operand.vmem [shape: f32[4,32,64], index: 11, kind: input, shape index: {}]
  %s12 = inlined_call_operand.vmem [shape: f32[4,64,32], index: 12, kind: input, shape index: {}]
  %s13 = inlined_call_operand.hbm [shape: f32[2,32], index: 13, kind: output, shape index: {0}]
  %s14 = inlined_call_operand.hbm [shape: f32[2,32], index: 14, kind: output, shape index: {1}]
  %s15 = inlined_call_operand.hbm [shape: f32[1,1], index: 15, kind: output, shape index: {2}]
  %16 = xla_tuple %s13, %s14, %s15
  %s17 = sld [smem:[#allocation0]]
  $region78: #{_forward_core.1} parent=0
    _
  %s19 = ssub.s32 1, %s17
  %s20 = scalar_select 0, %s19, %s17
  %21 = sst [smem:[#allocation2]] %s9
  $region1: #{_forward_core.1} parent=0
    #allocation3 [shape = 'u8[1024]{0}', space=vmem, size = 0x400, scoped, tag = 'output window, operand 0, single buffered']
    #allocation4 [shape = 's32[1]{0}', space=sflag, size = 0x4, scoped, tag = 'scoped memory for _forward_core.1']
    #allocation5 [shape = 'u8[1024]{0}', space=vmem, size = 0x400, scoped, tag = 'output window, operand 1, single buffered']
    #allocation6 [shape = 's32[1]{0}', space=sflag, size = 0x4, scoped, tag = 'scoped memory for _forward_core.1']
    #allocation7 [shape = 'u8[512]{0}', space=vmem, size = 0x400, scoped, tag = 'output window, operand 2, single buffered']
    %22 = vsyncpa [#allocation4], 0
    %23 = vsyncpa [#allocation6], 0
    // Predicated region
    $region2: #{_forward_core.1} parent=1 // pred_check
      _
    $region3: #{_forward_core.1} parent=1 // pred_check_branch
      %25 = sbr.rel (0) target = $region5
    $region4: #{_forward_core.1} parent=1 // pred_region
      _
    $region5: #{_forward_core.1} parent=1 // pred_fallthru
      _
    // Predicated region
    $region6: #{_forward_core.1} parent=1 // pred_check
      _
    $region7: #{_forward_core.1} parent=1 // pred_check_branch
      %27 = sbr.rel (0) target = $region9
    $region8: #{_forward_core.1} parent=1 // pred_region
      _
    $region9: #{_forward_core.1} parent=1 // pred_fallthru
      _
    // Predicated region
    $region10: #{_forward_core.1} parent=1 // pred_check
      _
    $region11: #{_forward_core.1} parent=1 // pred_check_branch
      %29 = sbr.rel (0) target = $region13
    $region12: #{_forward_core.1} parent=1 // pred_region
      _
    $region13: #{_forward_core.1} parent=1 // pred_fallthru
      _
    // Predicated region
    $region14: #{_forward_core.1} parent=1 // pred_check
      _
    $region15: #{_forward_core.1} parent=1 // pred_check_branch
      %31 = sbr.rel (0) target = $region17
    $region16: #{_forward_core.1} parent=1 // pred_region
      _
    $region17: #{_forward_core.1} parent=1 // pred_fallthru
      _
    // Predicated region
    $region18: #{_forward_core.1} parent=1 // pred_check
      _
    $region19: #{_forward_core.1} parent=1 // pred_check_branch
      %33 = sbr.rel (0) target = $region21
    $region20: #{_forward_core.1} parent=1 // pred_region
      _
    $region21: #{_forward_core.1} parent=1 // pred_fallthru
      _
    // Predicated region
    $region22: #{_forward_core.1} parent=1 // pred_check
      _
    $region23: #{_forward_core.1} parent=1 // pred_check_branch
      %35 = sbr.rel (0) target = $region25
    $region24: #{_forward_core.1} parent=1 // pred_region
      _
    $region25: #{_forward_core.1} parent=1 // pred_fallthru
      _
    // Predicated region
    $region26: #{_forward_core.1} parent=1 // pred_check
      _
    $region27: #{_forward_core.1} parent=1 // pred_check_branch
      %37 = sbr.rel (0) target = $region29
    $region28: #{_forward_core.1} parent=1 // pred_region
      _
    $region29: #{_forward_core.1} parent=1 // pred_fallthru
      _
    // Predicated region
    $region30: #{_forward_core.1} parent=1 // pred_check
      _
    $region31: #{_forward_core.1} parent=1 // pred_check_branch
      %39 = sbr.rel (0) target = $region33
    $region32: #{_forward_core.1} parent=1 // pred_region
      _
    $region33: #{_forward_core.1} parent=1 // pred_fallthru
      _
    // Predicated region
    $region34: #{_forward_core.1} parent=1 // pred_check
      _
    $region35: #{_forward_core.1} parent=1 // pred_check_branch
      %41 = sbr.rel (0) target = $region37
    $region36: #{_forward_core.1} parent=1 // pred_region
      _
    $region37: #{_forward_core.1} parent=1 // pred_fallthru
      _
    // Predicated region
    $region38: #{_forward_core.1} parent=1 // pred_check
      _
    $region39: #{_forward_core.1} parent=1 // pred_check_branch
      %43 = sbr.rel (0) target = $region41
    $region40: #{_forward_core.1} parent=1 // pred_region
      _
    $region41: #{_forward_core.1} parent=1 // pred_fallthru
      _
    // Predicated region
    $region42: #{_forward_core.1} parent=1 // pred_check
      _
    $region43: #{_forward_core.1} parent=1 // pred_check_branch
      %45 = sbr.rel (0) target = $region45
    $region44: #{_forward_core.1} parent=1 // pred_region
      _
    $region45: #{_forward_core.1} parent=1 // pred_fallthru
      _
    // Predicated region
    $region46: #{_forward_core.1} parent=1 // pred_check
      _
    $region47: #{_forward_core.1} parent=1 // pred_check_branch
      %47 = sbr.rel (0) target = $region49
    $region48: #{_forward_core.1} parent=1 // pred_region
      _
    $region49: #{_forward_core.1} parent=1 // pred_fallthru
      _
    // Predicated region
    $region50: #{_forward_core.1} parent=1 // pred_check
      _
    $region51: #{_forward_core.1} parent=1 // pred_check_branch
      %49 = sbr.rel (0) target = $region53
    $region52: #{_forward_core.1} parent=1 // pred_region
      _
    $region53: #{_forward_core.1} parent=1 // pred_fallthru
      _
    %v50 = vld [vmem:[%s0] sm:$0xff]
    %v51 = vld [vmem:[%s0 + $0x8] sm:$0xff]
    %v52 = vld [vmem:[%s3] sm:$0xff]
    %v53 = vld [vmem:[%s3 + $0x8] sm:$0xff]
    %v54 = vld [vmem:[%s10] sm:$0xff]
    %v55 = vld [vmem:[%s10 + $0x8] sm:$0xff]
    %v56 = vld [vmem:[%s10 + $0x10] sm:$0xff]
    %v57 = vld [vmem:[%s10 + $0x18] sm:$0xff]
    %s58 = scalar_lea.vmem %s10, 32
    %v59 = vld [vmem:[%s58] sm:$0xff]
    %v60 = vld [vmem:[%s58 + $0x8] sm:$0xff]
    %v61 = vld [vmem:[%s58 + $0x10] sm:$0xff]
    %v62 = vld [vmem:[%s58 + $0x18] sm:$0xff]
    %s63 = scalar_lea.vmem %s10, 64
    %v64 = vld [vmem:[%s63] sm:$0xff]
    %v65 = vld [vmem:[%s63 + $0x8] sm:$0xff]
    %v66 = vld [vmem:[%s63 + $0x10] sm:$0xff]
    %v67 = vld [vmem:[%s63 + $0x18] sm:$0xff]
    %s68 = scalar_lea.vmem %s10, 96
    %v69 = vld [vmem:[%s68] sm:$0xff]
    %v70 = vld [vmem:[%s68 + $0x8] sm:$0xff]
    %v71 = vld [vmem:[%s68 + $0x10] sm:$0xff]
    %v72 = vld [vmem:[%s68 + $0x18] sm:$0xff]
    %s73 = scalar_lea.vmem %s10, 128
    %v74 = vld [vmem:[%s73] sm:$0xff]
    %v75 = vld [vmem:[%s73 + $0x8] sm:$0xff]
    %v76 = vld [vmem:[%s73 + $0x10] sm:$0xff]
    %v77 = vld [vmem:[%s73 + $0x18] sm:$0xff]
    %v78 = vld [vmem:[%s11] sm:$0xff]
    %v79 = vld [vmem:[%s11 + $0x8] sm:$0xff]
    %v80 = vld [vmem:[%s11 + $0x10] sm:$0xff]
    %v81 = vld [vmem:[%s11 + $0x18] sm:$0xff]
    %v82 = vld [vmem:[%s12] sm:$0xff]
    %v83 = vld [vmem:[%s12 + $0x8] sm:$0xff]
    %v84 = vld [vmem:[%s12 + $0x10] sm:$0xff]
    %v85 = vld [vmem:[%s12 + $0x18] sm:$0xff]
    %v86 = vld [vmem:[%s12 + $0x20] sm:$0xff]
    %v87 = vld [vmem:[%s12 + $0x28] sm:$0xff]
    %v88 = vld [vmem:[%s12 + $0x30] sm:$0xff]
    %v89 = vld [vmem:[%s12 + $0x38] sm:$0xff]
    %vm90 = vcmask 261120
    %v92 = vsel %vm90, %v50, 0
    %v95 = vsel %vm90, %v51, 0
    %97 = vmatpush.msra.mxu0 0.0
    %98 = vmatpush.msra.mxu0 0.0
    %99 = vmatpush.msra.mxu0 0.0
    %100 = vmatpush.msra.mxu0 0.0
    %101 = vmatpush.msra.mxu0 0.0
    %102 = vmatpush.msra.mxu0 0.0
    %103 = vmatpush.msra.mxu0 0.0
    %104 = vmatpush.msra.mxu0 0.0
    %105 = vmatpush.msra.mxu0 0.0
    %106 = vmatpush.msra.mxu0 0.0
    %107 = vmatpush.msra.mxu0 0.0
    %108 = vmatpush.msra.mxu0 0.0
    %109 = vmatpush.msra.mxu0 %v57
    %110 = vmatpush.msra.mxu0 %v56
    %111 = vmatpush.msra.mxu0 %v55
    %112 = vmatpush.msra.mxu0 %v54
    %113 = vmatmul.f32.gmra.mxu0 %v92
    %v114 = vpop.f32.mrf.mxu0
    %v115 = vadd.f32 0.0, %v114
    %116 = vmatmul.f32.gmra.mxu0 %v95
    %v117 = vpop.f32.mrf.mxu0
    %v118 = vadd.f32 0.0, %v117
    %119 = vdwg.mxu0
    %v121 = vsel %vm90, %v115, 0
    %v124 = vsel %vm90, %v118, 0
    %126 = vmatpush.msra.mxu0 0.0
    %127 = vmatpush.msra.mxu0 0.0
    %128 = vmatpush.msra.mxu0 0.0
    %129 = vmatpush.msra.mxu0 0.0
    %130 = vmatpush.msra.mxu0 0.0
    %131 = vmatpush.msra.mxu0 0.0
    %132 = vmatpush.msra.mxu0 0.0
    %133 = vmatpush.msra.mxu0 0.0
    %134 = vmatpush.msra.mxu0 0.0
    %135 = vmatpush.msra.mxu0 0.0
    %136 = vmatpush.msra.mxu0 0.0
    %137 = vmatpush.msra.mxu0 0.0
    %138 = vmatpush.msra.mxu0 %v62
    %139 = vmatpush.msra.mxu0 %v61
    %140 = vmatpush.msra.mxu0 %v60
    %141 = vmatpush.msra.mxu0 %v59
    %142 = vmatmul.f32.gmra.mxu0 %v121
    %v143 = vpop.f32.mrf.mxu0
    %v144 = vadd.f32 0.0, %v143
    %145 = vmatmul.f32.gmra.mxu0 %v124
    %v146 = vpop.f32.mrf.mxu0
    %v147 = vadd.f32 0.0, %v146
    %148 = vdwg.mxu0
    %149 = vmatpush.msra.mxu0 0.0
    %150 = vmatpush.msra.mxu0 0.0
    %151 = vmatpush.msra.mxu0 0.0
    %152 = vmatpush.msra.mxu0 0.0
    %153 = vmatpush.msra.mxu0 0.0
    %154 = vmatpush.msra.mxu0 0.0
    %155 = vmatpush.msra.mxu0 0.0
    %156 = vmatpush.msra.mxu0 0.0
    %157 = vmatpush.msra.mxu0 0.0
    %158 = vmatpush.msra.mxu0 0.0
    %159 = vmatpush.msra.mxu0 0.0
    %160 = vmatpush.msra.mxu0 0.0
    %161 = vmatpush.msra.mxu0 %v67
    %162 = vmatpush.msra.mxu0 %v66
    %163 = vmatpush.msra.mxu0 %v65
    %164 = vmatpush.msra.mxu0 %v64
    %165 = vmatmul.f32.gmra.mxu0 %v121
    %v166 = vpop.f32.mrf.mxu0
    %v167 = vadd.f32 0.0, %v166
    %168 = vmatmul.f32.gmra.mxu0 %v124
    %v169 = vpop.f32.mrf.mxu0
    %v170 = vadd.f32 0.0, %v169
    %171 = vdwg.mxu0
    %172 = vmatpush.msra.mxu0 0.0
    %173 = vmatpush.msra.mxu0 0.0
    %174 = vmatpush.msra.mxu0 0.0
    %175 = vmatpush.msra.mxu0 0.0
    %176 = vmatpush.msra.mxu0 0.0
    %177 = vmatpush.msra.mxu0 0.0
    %178 = vmatpush.msra.mxu0 0.0
    %179 = vmatpush.msra.mxu0 0.0
    %180 = vmatpush.msra.mxu0 0.0
    %181 = vmatpush.msra.mxu0 0.0
    %182 = vmatpush.msra.mxu0 0.0
    %183 = vmatpush.msra.mxu0 0.0
    %184 = vmatpush.msra.mxu0 %v72
    %185 = vmatpush.msra.mxu0 %v71
    %186 = vmatpush.msra.mxu0 %v70
    %187 = vmatpush.msra.mxu0 %v69
    %188 = vmatmul.f32.gmra.mxu0 %v121
    %v189 = vpop.f32.mrf.mxu0
    %v190 = vadd.f32 0.0, %v189
    %191 = vmatmul.f32.gmra.mxu0 %v124
    %v192 = vpop.f32.mrf.mxu0
    %v193 = vadd.f32 0.0, %v192
    %194 = vdwg.mxu0
    %v196 = vsel %vm90, %v144, 0
    %v199 = vsel %vm90, %v147, 0
    %v202 = vsel %vm90, %v167, 0
    %v205 = vsel %vm90, %v170, 0
    %207 = vmatpush.xpose.msra.mxu0 0.0
    %208 = vmatpush.xpose.msra.mxu0 0.0
    %209 = vmatpush.xpose.msra.mxu0 0.0
    %210 = vmatpush.xpose.msra.mxu0 0.0
    %211 = vmatpush.xpose.msra.mxu0 0.0
    %212 = vmatpush.xpose.msra.mxu0 0.0
    %213 = vmatpush.xpose.msra.mxu0 0.0
    %214 = vmatpush.xpose.msra.mxu0 0.0
    %215 = vmatpush.xpose.msra.mxu0 0.0
    %216 = vmatpush.xpose.msra.mxu0 0.0
    %217 = vmatpush.xpose.msra.mxu0 0.0
    %218 = vmatpush.xpose.msra.mxu0 0.0
    %219 = vmatpush.xpose.msra.mxu0 0.0
    %220 = vmatpush.xpose.msra.mxu0 0.0
    %221 = vmatpush.xpose.msra.mxu0 %v205
    %222 = vmatpush.xpose.msra.mxu0 %v202
    %223 = vmatmul.f32.gmra.mxu0 %v196
    %v224 = vpop.f32.mrf.mxu0
    %v225 = vadd.f32 0.0, %v224
    %226 = vmatmul.f32.gmra.mxu0 %v199
    %v227 = vpop.f32.mrf.mxu0
    %v228 = vadd.f32 0.0, %v227
    %229 = vdwg.mxu0
    %v230 = vmul.f32 %v225, 0.17677669
    %v231 = vmul.f32 %v228, 0.17677669
    %v232 = vadd.f32 %v230, %v52
    %v233 = vadd.f32 %v231, %v53
    %vm234 = vcmask 130048
    %v235 = vsel %vm234, %v232, -inf
    %236 = vmax.xlane.f32.xlu0 %v235
    %v237 = vpop.xlane.xlu0 %236
    %v238 = vsel %vm234, %v233, -inf
    %239 = vmax.xlane.f32.xlu0 %v238
    %v240 = vpop.xlane.xlu0 %239
    %v241 = vsub.f32 %v232, %v237
    %v242 = vsub.f32 %v233, %v240
    %v243 = vmul.f32 %v241, 1.442695
    %v244 = vpow.pop %v243
    %v245 = vmul.f32 %v242, 1.442695
    %v246 = vpow.pop %v245
    %v247 = vsel %vm234, %v244, 0.0
    %248 = vadd.xlane.f32.xlu0 %v247
    %v249 = vpop.xlane.xlu0 %248
    %v250 = vsel %vm234, %v246, 0.0
    %251 = vadd.xlane.f32.xlu0 %v250
    %v252 = vpop.xlane.xlu0 %251
    %v253 = vrcp.pop %v249
    %v254 = vmul.f32 %v249, %v253
    %v255 = vsub.f32 1.0, %v254
    %v256 = vmul.f32 %v253, %v255
    %v257 = vadd.f32 %v253, %v256
    %vm258 = vweird.f32 %v249
    %vm259 = vweird.f32 %v253
    %vm260 = vmor %vm258, %vm259
    %v261 = vsel %vm260, %v253, %v257
    %v262 = vand.u32 2147483647, %v249
    %vm263 = vcmp.eq.f32.partialorder %v262, 8.507059e+37
    %v264 = vand.u32 %v249, 2147483648
    %v265 = vor.u32 1.1754944e-38, %v264
    %v266 = vsel %vm263, %v265, %v261
    %v267 = vmul.f32 %v244, %v266
    %v268 = vrcp.pop %v252
    %v269 = vmul.f32 %v252, %v268
    %v270 = vsub.f32 1.0, %v269
    %v271 = vmul.f32 %v268, %v270
    %v272 = vadd.f32 %v268, %v271
    %vm273 = vweird.f32 %v252
    %vm274 = vweird.f32 %v268
    %vm275 = vmor %vm273, %vm274
    %v276 = vsel %vm275, %v268, %v272
    %v277 = vand.u32 2147483647, %v252
    %vm278 = vcmp.eq.f32.partialorder %v277, 8.507059e+37
    %v279 = vand.u32 %v252, 2147483648
    %v280 = vor.u32 1.1754944e-38, %v279
    %v281 = vsel %vm278, %v280, %v276
    %v282 = vmul.f32 %v246, %v281
    %v284 = vsel %vm234, %v267, 0
    %v287 = vsel %vm234, %v282, 0
    %289 = vmatpush.msra.mxu0 0.0
    %290 = vmatpush.msra.mxu0 0.0
    %291 = vmatpush.msra.mxu0 0.0
    %292 = vmatpush.msra.mxu0 0.0
    %293 = vmatpush.msra.mxu0 0.0
    %294 = vmatpush.msra.mxu0 0.0
    %295 = vmatpush.msra.mxu0 0.0
    %296 = vmatpush.msra.mxu0 0.0
    %297 = vmatpush.msra.mxu0 0.0
    %298 = vmatpush.msra.mxu0 0.0
    %299 = vmatpush.msra.mxu0 0.0
    %300 = vmatpush.msra.mxu0 0.0
    %301 = vmatpush.msra.mxu0 0.0
    %302 = vmatpush.msra.mxu0 0.0
    %303 = vmatpush.msra.mxu0 %v193
    %304 = vmatpush.msra.mxu0 %v190
    %305 = vmatmul.f32.gmra.mxu0 %v284
    %v306 = vpop.f32.mrf.mxu0
    %v307 = vadd.f32 0.0, %v306
    %308 = vmatmul.f32.gmra.mxu0 %v287
    %v309 = vpop.f32.mrf.mxu0
    %v310 = vadd.f32 0.0, %v309
    %311 = vdwg.mxu0
    %v313 = vsel %vm90, %v307, 0
    %v316 = vsel %vm90, %v310, 0
    %318 = vmatpush.msra.mxu0 0.0
    %319 = vmatpush.msra.mxu0 0.0
    %320 = vmatpush.msra.mxu0 0.0
    %321 = vmatpush.msra.mxu0 0.0
    %322 = vmatpush.msra.mxu0 0.0
    %323 = vmatpush.msra.mxu0 0.0
    %324 = vmatpush.msra.mxu0 0.0
    %325 = vmatpush.msra.mxu0 0.0
    %326 = vmatpush.msra.mxu0 0.0
    %327 = vmatpush.msra.mxu0 0.0
    %328 = vmatpush.msra.mxu0 0.0
    %329 = vmatpush.msra.mxu0 0.0
    %330 = vmatpush.msra.mxu0 %v77
    %331 = vmatpush.msra.mxu0 %v76
    %332 = vmatpush.msra.mxu0 %v75
    %333 = vmatpush.msra.mxu0 %v74
    %334 = vmatmul.f32.gmra.mxu0 %v313
    %v335 = vpop.f32.mrf.mxu0
    %v336 = vadd.f32 0.0, %v335
    %337 = vmatmul.f32.gmra.mxu0 %v316
    %v338 = vpop.f32.mrf.mxu0
    %v339 = vadd.f32 0.0, %v338
    %340 = vdwg.mxu0
    %v341 = vadd.f32 %v115, %v336
    %v342 = vadd.f32 %v118, %v339
    %v344 = vsel %vm90, %v341, 0
    %v347 = vsel %vm90, %v342, 0
    %349 = vmatpush.msra.mxu0 0.0
    %350 = vmatpush.msra.mxu0 0.0
    %351 = vmatpush.msra.mxu0 0.0
    %352 = vmatpush.msra.mxu0 0.0
    %353 = vmatpush.msra.mxu0 0.0
    %354 = vmatpush.msra.mxu0 0.0
    %355 = vmatpush.msra.mxu0 0.0
    %356 = vmatpush.msra.mxu0 0.0
    %357 = vmatpush.msra.mxu0 0.0
    %358 = vmatpush.msra.mxu0 0.0
    %359 = vmatpush.msra.mxu0 0.0
    %360 = vmatpush.msra.mxu0 0.0
    %361 = vmatpush.msra.mxu0 %v81
    %362 = vmatpush.msra.mxu0 %v80
    %363 = vmatpush.msra.mxu0 %v79
    %364 = vmatpush.msra.mxu0 %v78
    %365 = vmatmul.f32.gmra.mxu0 %v344
    %v366 = vpop.f32.mrf.mxu0
    %v367 = vadd.f32 0.0, %v366
    %368 = vmatmul.f32.gmra.mxu0 %v347
    %v369 = vpop.f32.mrf.mxu0
    %v370 = vadd.f32 0.0, %v369
    %371 = vdwg.mxu0
    %v372 = vmax.f32 %v367, 0.0
    %v373 = vmax.f32 %v370, 0.0
    %vm374 = vcmask 523264
    %v376 = vsel %vm374, %v372, 0
    %v379 = vsel %vm374, %v373, 0
    %381 = vmatpush.msra.mxu0 0.0
    %382 = vmatpush.msra.mxu0 0.0
    %383 = vmatpush.msra.mxu0 0.0
    %384 = vmatpush.msra.mxu0 0.0
    %385 = vmatpush.msra.mxu0 0.0
    %386 = vmatpush.msra.mxu0 0.0
    %387 = vmatpush.msra.mxu0 0.0
    %388 = vmatpush.msra.mxu0 0.0
    %389 = vmatpush.msra.mxu0 %v89
    %390 = vmatpush.msra.mxu0 %v88
    %391 = vmatpush.msra.mxu0 %v87
    %392 = vmatpush.msra.mxu0 %v86
    %393 = vmatpush.msra.mxu0 %v85
    %394 = vmatpush.msra.mxu0 %v84
    %395 = vmatpush.msra.mxu0 %v83
    %396 = vmatpush.msra.mxu0 %v82
    %397 = vmatmul.f32.gmra.mxu0 %v376
    %v398 = vpop.f32.mrf.mxu0
    %v399 = vadd.f32 0.0, %v398
    %400 = vmatmul.f32.gmra.mxu0 %v379
    %v401 = vpop.f32.mrf.mxu0
    %v402 = vadd.f32 0.0, %v401
    %403 = vdwg.mxu0
    %v404 = vadd.f32 %v341, %v399
    %v405 = vadd.f32 %v342, %v402
    %v406 = vld [vmem:[%s1] sm:$0xff]
    %v407 = vld [vmem:[%s1 + $0x8] sm:$0xff]
    %v408 = vld [vmem:[%s4] sm:$0xff]
    %v409 = vld [vmem:[%s4 + $0x8] sm:$0xff]
    %s410 = scalar_lea.vmem %s10, 160
    %v411 = vld [vmem:[%s410] sm:$0xff]
    %v412 = vld [vmem:[%s410 + $0x8] sm:$0xff]
    %v413 = vld [vmem:[%s410 + $0x10] sm:$0xff]
    %v414 = vld [vmem:[%s410 + $0x18] sm:$0xff]
    %s415 = scalar_lea.vmem %s10, 192
    %v416 = vld [vmem:[%s415] sm:$0xff]
    %v417 = vld [vmem:[%s415 + $0x8] sm:$0xff]
    %v418 = vld [vmem:[%s415 + $0x10] sm:$0xff]
    %v419 = vld [vmem:[%s415 + $0x18] sm:$0xff]
    %s420 = scalar_lea.vmem %s10, 224
    %v421 = vld [vmem:[%s420] sm:$0xff]
    %v422 = vld [vmem:[%s420 + $0x8] sm:$0xff]
    %v423 = vld [vmem:[%s420 + $0x10] sm:$0xff]
    %v424 = vld [vmem:[%s420 + $0x18] sm:$0xff]
    %s425 = scalar_lea.vmem %s10, 256
    %v426 = vld [vmem:[%s425] sm:$0xff]
    %v427 = vld [vmem:[%s425 + $0x8] sm:$0xff]
    %v428 = vld [vmem:[%s425 + $0x10] sm:$0xff]
    %v429 = vld [vmem:[%s425 + $0x18] sm:$0xff]
    %s430 = scalar_lea.vmem %s10, 288
    %v431 = vld [vmem:[%s430] sm:$0xff]
    %v432 = vld [vmem:[%s430 + $0x8] sm:$0xff]
    %v433 = vld [vmem:[%s430 + $0x10] sm:$0xff]
    %v434 = vld [vmem:[%s430 + $0x18] sm:$0xff]
    %s435 = scalar_lea.vmem %s11, 32
    %v436 = vld [vmem:[%s435] sm:$0xff]
    %v437 = vld [vmem:[%s435 + $0x8] sm:$0xff]
    %v438 = vld [vmem:[%s435 + $0x10] sm:$0xff]
    %v439 = vld [vmem:[%s435 + $0x18] sm:$0xff]
    %s440 = scalar_lea.vmem %s12, 64
    %v441 = vld [vmem:[%s440] sm:$0xff]
    %v442 = vld [vmem:[%s440 + $0x8] sm:$0xff]
    %v443 = vld [vmem:[%s440 + $0x10] sm:$0xff]
    %v444 = vld [vmem:[%s440 + $0x18] sm:$0xff]
    %v445 = vld [vmem:[%s440 + $0x20] sm:$0xff]
    %v446 = vld [vmem:[%s440 + $0x28] sm:$0xff]
    %v447 = vld [vmem:[%s440 + $0x30] sm:$0xff]
    %v448 = vld [vmem:[%s440 + $0x38] sm:$0xff]
    %v450 = vsel %vm90, %v406, 0
    %v453 = vsel %vm90, %v407, 0
    %455 = vmatpush.msra.mxu0 0.0
    %456 = vmatpush.msra.mxu0 0.0
    %457 = vmatpush.msra.mxu0 0.0
    %458 = vmatpush.msra.mxu0 0.0
    %459 = vmatpush.msra.mxu0 0.0
    %460 = vmatpush.msra.mxu0 0.0
    %461 = vmatpush.msra.mxu0 0.0
    %462 = vmatpush.msra.mxu0 0.0
    %463 = vmatpush.msra.mxu0 0.0
    %464 = vmatpush.msra.mxu0 0.0
    %465 = vmatpush.msra.mxu0 0.0
    %466 = vmatpush.msra.mxu0 0.0
    %467 = vmatpush.msra.mxu0 %v414
    %468 = vmatpush.msra.mxu0 %v413
    %469 = vmatpush.msra.mxu0 %v412
    %470 = vmatpush.msra.mxu0 %v411
    %471 = vmatmul.f32.gmra.mxu0 %v450
    %v472 = vpop.f32.mrf.mxu0
    %v473 = vadd.f32 0.0, %v472
    %474 = vmatmul.f32.gmra.mxu0 %v453
    %v475 = vpop.f32.mrf.mxu0
    %v476 = vadd.f32 0.0, %v475
    %477 = vdwg.mxu0
    %v479 = vsel %vm90, %v473, 0
    %v482 = vsel %vm90, %v476, 0
    %484 = vmatpush.msra.mxu0 0.0
    %485 = vmatpush.msra.mxu0 0.0
    %486 = vmatpush.msra.mxu0 0.0
    %487 = vmatpush.msra.mxu0 0.0
    %488 = vmatpush.msra.mxu0 0.0
    %489 = vmatpush.msra.mxu0 0.0
    %490 = vmatpush.msra.mxu0 0.0
    %491 = vmatpush.msra.mxu0 0.0
    %492 = vmatpush.msra.mxu0 0.0
    %493 = vmatpush.msra.mxu0 0.0
    %494 = vmatpush.msra.mxu0 0.0
    %495 = vmatpush.msra.mxu0 0.0
    %496 = vmatpush.msra.mxu0 %v419
    %497 = vmatpush.msra.mxu0 %v418
    %498 = vmatpush.msra.mxu0 %v417
    %499 = vmatpush.msra.mxu0 %v416
    %500 = vmatmul.f32.gmra.mxu0 %v479
    %v501 = vpop.f32.mrf.mxu0
    %v502 = vadd.f32 0.0, %v501
    %503 = vmatmul.f32.gmra.mxu0 %v482
    %v504 = vpop.f32.mrf.mxu0
    %v505 = vadd.f32 0.0, %v504
    %506 = vdwg.mxu0
    %507 = vmatpush.msra.mxu0 0.0
    %508 = vmatpush.msra.mxu0 0.0
    %509 = vmatpush.msra.mxu0 0.0
    %510 = vmatpush.msra.mxu0 0.0
    %511 = vmatpush.msra.mxu0 0.0
    %512 = vmatpush.msra.mxu0 0.0
    %513 = vmatpush.msra.mxu0 0.0
    %514 = vmatpush.msra.mxu0 0.0
    %515 = vmatpush.msra.mxu0 0.0
    %516 = vmatpush.msra.mxu0 0.0
    %517 = vmatpush.msra.mxu0 0.0
    %518 = vmatpush.msra.mxu0 0.0
    %519 = vmatpush.msra.mxu0 %v424
    %520 = vmatpush.msra.mxu0 %v423
    %521 = vmatpush.msra.mxu0 %v422
    %522 = vmatpush.msra.mxu0 %v421
    %523 = vmatmul.f32.gmra.mxu0 %v479
    %v524 = vpop.f32.mrf.mxu0
    %v525 = vadd.f32 0.0, %v524
    %526 = vmatmul.f32.gmra.mxu0 %v482
    %v527 = vpop.f32.mrf.mxu0
    %v528 = vadd.f32 0.0, %v527
    %529 = vdwg.mxu0
    %530 = vmatpush.msra.mxu0 0.0
    %531 = vmatpush.msra.mxu0 0.0
    %532 = vmatpush.msra.mxu0 0.0
    %533 = vmatpush.msra.mxu0 0.0
    %534 = vmatpush.msra.mxu0 0.0
    %535 = vmatpush.msra.mxu0 0.0
    %536 = vmatpush.msra.mxu0 0.0
    %537 = vmatpush.msra.mxu0 0.0
    %538 = vmatpush.msra.mxu0 0.0
    %539 = vmatpush.msra.mxu0 0.0
    %540 = vmatpush.msra.mxu0 0.0
    %541 = vmatpush.msra.mxu0 0.0
    %542 = vmatpush.msra.mxu0 %v429
    %543 = vmatpush.msra.mxu0 %v428
    %544 = vmatpush.msra.mxu0 %v427
    %545 = vmatpush.msra.mxu0 %v426
    %546 = vmatmul.f32.gmra.mxu0 %v479
    %v547 = vpop.f32.mrf.mxu0
    %v548 = vadd.f32 0.0, %v547
    %549 = vmatmul.f32.gmra.mxu0 %v482
    %v550 = vpop.f32.mrf.mxu0
    %v551 = vadd.f32 0.0, %v550
    %552 = vdwg.mxu0
    %v554 = vsel %vm90, %v502, 0
    %v557 = vsel %vm90, %v505, 0
    %v560 = vsel %vm90, %v525, 0
    %v563 = vsel %vm90, %v528, 0
    %565 = vmatpush.xpose.msra.mxu0 0.0
    %566 = vmatpush.xpose.msra.mxu0 0.0
    %567 = vmatpush.xpose.msra.mxu0 0.0
    %568 = vmatpush.xpose.msra.mxu0 0.0
    %569 = vmatpush.xpose.msra.mxu0 0.0
    %570 = vmatpush.xpose.msra.mxu0 0.0
    %571 = vmatpush.xpose.msra.mxu0 0.0
    %572 = vmatpush.xpose.msra.mxu0 0.0
    %573 = vmatpush.xpose.msra.mxu0 0.0
    %574 = vmatpush.xpose.msra.mxu0 0.0
    %575 = vmatpush.xpose.msra.mxu0 0.0
    %576 = vmatpush.xpose.msra.mxu0 0.0
    %577 = vmatpush.xpose.msra.mxu0 0.0
    %578 = vmatpush.xpose.msra.mxu0 0.0
    %579 = vmatpush.xpose.msra.mxu0 %v563
    %580 = vmatpush.xpose.msra.mxu0 %v560
    %581 = vmatmul.f32.gmra.mxu0 %v554
    %v582 = vpop.f32.mrf.mxu0
    %v583 = vadd.f32 0.0, %v582
    %584 = vmatmul.f32.gmra.mxu0 %v557
    %v585 = vpop.f32.mrf.mxu0
    %v586 = vadd.f32 0.0, %v585
    %587 = vdwg.mxu0
    %v588 = vmul.f32 %v583, 0.17677669
    %v589 = vmul.f32 %v586, 0.17677669
    %v590 = vadd.f32 %v588, %v408
    %v591 = vadd.f32 %v589, %v409
    %v592 = vsel %vm234, %v590, -inf
    %593 = vmax.xlane.f32.xlu0 %v592
    %v594 = vpop.xlane.xlu0 %593
    %v595 = vsel %vm234, %v591, -inf
    %596 = vmax.xlane.f32.xlu0 %v595
    %v597 = vpop.xlane.xlu0 %596
    %v598 = vsub.f32 %v590, %v594
    %v599 = vsub.f32 %v591, %v597
    %v600 = vmul.f32 %v598, 1.442695
    %v601 = vpow.pop %v600
    %v602 = vmul.f32 %v599, 1.442695
    %v603 = vpow.pop %v602
    %v604 = vsel %vm234, %v601, 0.0
    %605 = vadd.xlane.f32.xlu0 %v604
    %v606 = vpop.xlane.xlu0 %605
    %v607 = vsel %vm234, %v603, 0.0
    %608 = vadd.xlane.f32.xlu0 %v607
    %v609 = vpop.xlane.xlu0 %608
    %v610 = vrcp.pop %v606
    %v611 = vmul.f32 %v606, %v610
    %v612 = vsub.f32 1.0, %v611
    %v613 = vmul.f32 %v610, %v612
    %v614 = vadd.f32 %v610, %v613
    %vm615 = vweird.f32 %v606
    %vm616 = vweird.f32 %v610
    %vm617 = vmor %vm615, %vm616
    %v618 = vsel %vm617, %v610, %v614
    %v619 = vand.u32 2147483647, %v606
    %vm620 = vcmp.eq.f32.partialorder %v619, 8.507059e+37
    %v621 = vand.u32 %v606, 2147483648
    %v622 = vor.u32 1.1754944e-38, %v621
    %v623 = vsel %vm620, %v622, %v618
    %v624 = vmul.f32 %v601, %v623
    %v625 = vrcp.pop %v609
    %v626 = vmul.f32 %v609, %v625
    %v627 = vsub.f32 1.0, %v626
    %v628 = vmul.f32 %v625, %v627
    %v629 = vadd.f32 %v625, %v628
    %vm630 = vweird.f32 %v609
    %vm631 = vweird.f32 %v625
    %vm632 = vmor %vm630, %vm631
    %v633 = vsel %vm632, %v625, %v629
    %v634 = vand.u32 2147483647, %v609
    %vm635 = vcmp.eq.f32.partialorder %v634, 8.507059e+37
    %v636 = vand.u32 %v609, 2147483648
    %v637 = vor.u32 1.1754944e-38, %v636
    %v638 = vsel %vm635, %v637, %v633
    %v639 = vmul.f32 %v603, %v638
    %v641 = vsel %vm234, %v624, 0
    %v644 = vsel %vm234, %v639, 0
    %646 = vmatpush.msra.mxu0 0.0
    %647 = vmatpush.msra.mxu0 0.0
    %648 = vmatpush.msra.mxu0 0.0
    %649 = vmatpush.msra.mxu0 0.0
    %650 = vmatpush.msra.mxu0 0.0
    %651 = vmatpush.msra.mxu0 0.0
    %652 = vmatpush.msra.mxu0 0.0
    %653 = vmatpush.msra.mxu0 0.0
    %654 = vmatpush.msra.mxu0 0.0
    %655 = vmatpush.msra.mxu0 0.0
    %656 = vmatpush.msra.mxu0 0.0
    %657 = vmatpush.msra.mxu0 0.0
    %658 = vmatpush.msra.mxu0 0.0
    %659 = vmatpush.msra.mxu0 0.0
    %660 = vmatpush.msra.mxu0 %v551
    %661 = vmatpush.msra.mxu0 %v548
    %662 = vmatmul.f32.gmra.mxu0 %v641
    %v663 = vpop.f32.mrf.mxu0
    %v664 = vadd.f32 0.0, %v663
    %665 = vmatmul.f32.gmra.mxu0 %v644
    %v666 = vpop.f32.mrf.mxu0
    %v667 = vadd.f32 0.0, %v666
    %668 = vdwg.mxu0
    %v670 = vsel %vm90, %v664, 0
    %v673 = vsel %vm90, %v667, 0
    %675 = vmatpush.msra.mxu0 0.0
    %676 = vmatpush.msra.mxu0 0.0
    %677 = vmatpush.msra.mxu0 0.0
    %678 = vmatpush.msra.mxu0 0.0
    %679 = vmatpush.msra.mxu0 0.0
    %680 = vmatpush.msra.mxu0 0.0
    %681 = vmatpush.msra.mxu0 0.0
    %682 = vmatpush.msra.mxu0 0.0
    %683 = vmatpush.msra.mxu0 0.0
    %684 = vmatpush.msra.mxu0 0.0
    %685 = vmatpush.msra.mxu0 0.0
    %686 = vmatpush.msra.mxu0 0.0
    %687 = vmatpush.msra.mxu0 %v434
    %688 = vmatpush.msra.mxu0 %v433
    %689 = vmatpush.msra.mxu0 %v432
    %690 = vmatpush.msra.mxu0 %v431
    %691 = vmatmul.f32.gmra.mxu0 %v670
    %v692 = vpop.f32.mrf.mxu0
    %v693 = vadd.f32 0.0, %v692
    %694 = vmatmul.f32.gmra.mxu0 %v673
    %v695 = vpop.f32.mrf.mxu0
    %v696 = vadd.f32 0.0, %v695
    %697 = vdwg.mxu0
    %v698 = vadd.f32 %v473, %v693
    %v699 = vadd.f32 %v476, %v696
    %v701 = vsel %vm90, %v698, 0
    %v704 = vsel %vm90, %v699, 0
    %706 = vmatpush.msra.mxu0 0.0
    %707 = vmatpush.msra.mxu0 0.0
    %708 = vmatpush.msra.mxu0 0.0
    %709 = vmatpush.msra.mxu0 0.0
    %710 = vmatpush.msra.mxu0 0.0
    %711 = vmatpush.msra.mxu0 0.0
    %712 = vmatpush.msra.mxu0 0.0
    %713 = vmatpush.msra.mxu0 0.0
    %714 = vmatpush.msra.mxu0 0.0
    %715 = vmatpush.msra.mxu0 0.0
    %716 = vmatpush.msra.mxu0 0.0
    %717 = vmatpush.msra.mxu0 0.0
    %718 = vmatpush.msra.mxu0 %v439
    %719 = vmatpush.msra.mxu0 %v438
    %720 = vmatpush.msra.mxu0 %v437
    %721 = vmatpush.msra.mxu0 %v436
    %722 = vmatmul.f32.gmra.mxu0 %v701
    %v723 = vpop.f32.mrf.mxu0
    %v724 = vadd.f32 0.0, %v723
    %725 = vmatmul.f32.gmra.mxu0 %v704
    %v726 = vpop.f32.mrf.mxu0
    %v727 = vadd.f32 0.0, %v726
    %728 = vdwg.mxu0
    %v729 = vmax.f32 %v724, 0.0
    %v730 = vmax.f32 %v727, 0.0
    %v732 = vsel %vm374, %v729, 0
    %v735 = vsel %vm374, %v730, 0
    %737 = vmatpush.msra.mxu0 0.0
    %738 = vmatpush.msra.mxu0 0.0
    %739 = vmatpush.msra.mxu0 0.0
    %740 = vmatpush.msra.mxu0 0.0
    %741 = vmatpush.msra.mxu0 0.0
    %742 = vmatpush.msra.mxu0 0.0
    %743 = vmatpush.msra.mxu0 0.0
    %744 = vmatpush.msra.mxu0 0.0
    %745 = vmatpush.msra.mxu0 %v448
    %746 = vmatpush.msra.mxu0 %v447
    %747 = vmatpush.msra.mxu0 %v446
    %748 = vmatpush.msra.mxu0 %v445
    %749 = vmatpush.msra.mxu0 %v444
    %750 = vmatpush.msra.mxu0 %v443
    %751 = vmatpush.msra.mxu0 %v442
    %752 = vmatpush.msra.mxu0 %v441
    %753 = vmatmul.f32.gmra.mxu0 %v732
    %v754 = vpop.f32.mrf.mxu0
    %v755 = vadd.f32 0.0, %v754
    %756 = vmatmul.f32.gmra.mxu0 %v735
    %v757 = vpop.f32.mrf.mxu0
    %v758 = vadd.f32 0.0, %v757
    %759 = vdwg.mxu0
    %v760 = vadd.f32 %v698, %v755
    %v761 = vadd.f32 %v699, %v758
    %v762 = vld [vmem:[%s6] sm:$0xff]
    %v763 = vld [vmem:[%s6 + $0x8] sm:$0xff]
    %v765 = vsel %vm234, %v762, 0
    %v768 = vsel %vm234, %v763, 0
    %770 = vmatpush.msra.mxu0 0.0
    %771 = vmatpush.msra.mxu0 0.0
    %772 = vmatpush.msra.mxu0 0.0
    %773 = vmatpush.msra.mxu0 0.0
    %774 = vmatpush.msra.mxu0 0.0
    %775 = vmatpush.msra.mxu0 0.0
    %776 = vmatpush.msra.mxu0 0.0
    %777 = vmatpush.msra.mxu0 0.0
    %778 = vmatpush.msra.mxu0 0.0
    %779 = vmatpush.msra.mxu0 0.0
    %780 = vmatpush.msra.mxu0 0.0
    %781 = vmatpush.msra.mxu0 0.0
    %782 = vmatpush.msra.mxu0 0.0
    %783 = vmatpush.msra.mxu0 0.0
    %784 = vmatpush.msra.mxu0 %v405
    %785 = vmatpush.msra.mxu0 %v404
    %786 = vmatmul.f32.gmra.mxu0 %v765
    %v787 = vpop.f32.mrf.mxu0
    %v788 = vadd.f32 0.0, %v787
    %789 = vmatmul.f32.gmra.mxu0 %v768
    %v790 = vpop.f32.mrf.mxu0
    %v791 = vadd.f32 0.0, %v790
    %792 = vdwg.mxu0
    %v793 = vadd.f32 %v760, %v788
    %v794 = vadd.f32 %v761, %v791
    %s795 = scalar_lea.vmem %s10, 320
    %v796 = vld [vmem:[%s795] sm:$0xff]
    %v797 = vld [vmem:[%s795 + $0x8] sm:$0xff]
    %v798 = vld [vmem:[%s795 + $0x10] sm:$0xff]
    %v799 = vld [vmem:[%s795 + $0x18] sm:$0xff]
    %s800 = scalar_lea.vmem %s10, 352
    %v801 = vld [vmem:[%s800] sm:$0xff]
    %v802 = vld [vmem:[%s800 + $0x8] sm:$0xff]
    %v803 = vld [vmem:[%s800 + $0x10] sm:$0xff]
    %v804 = vld [vmem:[%s800 + $0x18] sm:$0xff]
    %s805 = scalar_lea.vmem %s10, 384
    %v806 = vld [vmem:[%s805] sm:$0xff]
    %v807 = vld [vmem:[%s805 + $0x8] sm:$0xff]
    %v808 = vld [vmem:[%s805 + $0x10] sm:$0xff]
    %v809 = vld [vmem:[%s805 + $0x18] sm:$0xff]
    %s810 = scalar_lea.vmem %s10, 416
    %v811 = vld [vmem:[%s810] sm:$0xff]
    %v812 = vld [vmem:[%s810 + $0x8] sm:$0xff]
    %v813 = vld [vmem:[%s810 + $0x10] sm:$0xff]
    %v814 = vld [vmem:[%s810 + $0x18] sm:$0xff]
    %s815 = scalar_lea.vmem %s10, 448
    %v816 = vld [vmem:[%s815] sm:$0xff]
    %v817 = vld [vmem:[%s815 + $0x8] sm:$0xff]
    %v818 = vld [vmem:[%s815 + $0x10] sm:$0xff]
    %v819 = vld [vmem:[%s815 + $0x18] sm:$0xff]
    %s820 = scalar_lea.vmem %s11, 64
    %v821 = vld [vmem:[%s820] sm:$0xff]
    %v822 = vld [vmem:[%s820 + $0x8] sm:$0xff]
    %v823 = vld [vmem:[%s820 + $0x10] sm:$0xff]
    %v824 = vld [vmem:[%s820 + $0x18] sm:$0xff]
    %s825 = scalar_lea.vmem %s12, 128
    %v826 = vld [vmem:[%s825] sm:$0xff]
    %v827 = vld [vmem:[%s825 + $0x8] sm:$0xff]
    %v828 = vld [vmem:[%s825 + $0x10] sm:$0xff]
    %v829 = vld [vmem:[%s825 + $0x18] sm:$0xff]
    %v830 = vld [vmem:[%s825 + $0x20] sm:$0xff]
    %v831 = vld [vmem:[%s825 + $0x28] sm:$0xff]
    %v832 = vld [vmem:[%s825 + $0x30] sm:$0xff]
    %v833 = vld [vmem:[%s825 + $0x38] sm:$0xff]
    %v835 = vsel %vm90, %v793, 0
    %v838 = vsel %vm90, %v794, 0
    %840 = vmatpush.msra.mxu0 0.0
    %841 = vmatpush.msra.mxu0 0.0
    %842 = vmatpush.msra.mxu0 0.0
    %843 = vmatpush.msra.mxu0 0.0
    %844 = vmatpush.msra.mxu0 0.0
    %845 = vmatpush.msra.mxu0 0.0
    %846 = vmatpush.msra.mxu0 0.0
    %847 = vmatpush.msra.mxu0 0.0
    %848 = vmatpush.msra.mxu0 0.0
    %849 = vmatpush.msra.mxu0 0.0
    %850 = vmatpush.msra.mxu0 0.0
    %851 = vmatpush.msra.mxu0 0.0
    %852 = vmatpush.msra.mxu0 %v799
    %853 = vmatpush.msra.mxu0 %v798
    %854 = vmatpush.msra.mxu0 %v797
    %855 = vmatpush.msra.mxu0 %v796
    %856 = vmatmul.f32.gmra.mxu0 %v835
    %v857 = vpop.f32.mrf.mxu0
    %v858 = vadd.f32 0.0, %v857
    %859 = vmatmul.f32.gmra.mxu0 %v838
    %v860 = vpop.f32.mrf.mxu0
    %v861 = vadd.f32 0.0, %v860
    %862 = vdwg.mxu0
    %v864 = vsel %vm90, %v858, 0
    %v867 = vsel %vm90, %v861, 0
    %869 = vmatpush.msra.mxu0 0.0
    %870 = vmatpush.msra.mxu0 0.0
    %871 = vmatpush.msra.mxu0 0.0
    %872 = vmatpush.msra.mxu0 0.0
    %873 = vmatpush.msra.mxu0 0.0
    %874 = vmatpush.msra.mxu0 0.0
    %875 = vmatpush.msra.mxu0 0.0
    %876 = vmatpush.msra.mxu0 0.0
    %877 = vmatpush.msra.mxu0 0.0
    %878 = vmatpush.msra.mxu0 0.0
    %879 = vmatpush.msra.mxu0 0.0
    %880 = vmatpush.msra.mxu0 0.0
    %881 = vmatpush.msra.mxu0 %v804
    %882 = vmatpush.msra.mxu0 %v803
    %883 = vmatpush.msra.mxu0 %v802
    %884 = vmatpush.msra.mxu0 %v801
    %885 = vmatmul.f32.gmra.mxu0 %v864
    %v886 = vpop.f32.mrf.mxu0
    %v887 = vadd.f32 0.0, %v886
    %888 = vmatmul.f32.gmra.mxu0 %v867
    %v889 = vpop.f32.mrf.mxu0
    %v890 = vadd.f32 0.0, %v889
    %891 = vdwg.mxu0
    %892 = vmatpush.msra.mxu0 0.0
    %893 = vmatpush.msra.mxu0 0.0
    %894 = vmatpush.msra.mxu0 0.0
    %895 = vmatpush.msra.mxu0 0.0
    %896 = vmatpush.msra.mxu0 0.0
    %897 = vmatpush.msra.mxu0 0.0
    %898 = vmatpush.msra.mxu0 0.0
    %899 = vmatpush.msra.mxu0 0.0
    %900 = vmatpush.msra.mxu0 0.0
    %901 = vmatpush.msra.mxu0 0.0
    %902 = vmatpush.msra.mxu0 0.0
    %903 = vmatpush.msra.mxu0 0.0
    %904 = vmatpush.msra.mxu0 %v809
    %905 = vmatpush.msra.mxu0 %v808
    %906 = vmatpush.msra.mxu0 %v807
    %907 = vmatpush.msra.mxu0 %v806
    %908 = vmatmul.f32.gmra.mxu0 %v864
    %v909 = vpop.f32.mrf.mxu0
    %v910 = vadd.f32 0.0, %v909
    %911 = vmatmul.f32.gmra.mxu0 %v867
    %v912 = vpop.f32.mrf.mxu0
    %v913 = vadd.f32 0.0, %v912
    %914 = vdwg.mxu0
    %915 = vmatpush.msra.mxu0 0.0
    %916 = vmatpush.msra.mxu0 0.0
    %917 = vmatpush.msra.mxu0 0.0
    %918 = vmatpush.msra.mxu0 0.0
    %919 = vmatpush.msra.mxu0 0.0
    %920 = vmatpush.msra.mxu0 0.0
    %921 = vmatpush.msra.mxu0 0.0
    %922 = vmatpush.msra.mxu0 0.0
    %923 = vmatpush.msra.mxu0 0.0
    %924 = vmatpush.msra.mxu0 0.0
    %925 = vmatpush.msra.mxu0 0.0
    %926 = vmatpush.msra.mxu0 0.0
    %927 = vmatpush.msra.mxu0 %v814
    %928 = vmatpush.msra.mxu0 %v813
    %929 = vmatpush.msra.mxu0 %v812
    %930 = vmatpush.msra.mxu0 %v811
    %931 = vmatmul.f32.gmra.mxu0 %v864
    %v932 = vpop.f32.mrf.mxu0
    %v933 = vadd.f32 0.0, %v932
    %934 = vmatmul.f32.gmra.mxu0 %v867
    %v935 = vpop.f32.mrf.mxu0
    %v936 = vadd.f32 0.0, %v935
    %937 = vdwg.mxu0
    %v939 = vsel %vm90, %v887, 0
    %v942 = vsel %vm90, %v890, 0
    %v945 = vsel %vm90, %v910, 0
    %v948 = vsel %vm90, %v913, 0
    %950 = vmatpush.xpose.msra.mxu0 0.0
    %951 = vmatpush.xpose.msra.mxu0 0.0
    %952 = vmatpush.xpose.msra.mxu0 0.0
    %953 = vmatpush.xpose.msra.mxu0 0.0
    %954 = vmatpush.xpose.msra.mxu0 0.0
    %955 = vmatpush.xpose.msra.mxu0 0.0
    %956 = vmatpush.xpose.msra.mxu0 0.0
    %957 = vmatpush.xpose.msra.mxu0 0.0
    %958 = vmatpush.xpose.msra.mxu0 0.0
    %959 = vmatpush.xpose.msra.mxu0 0.0
    %960 = vmatpush.xpose.msra.mxu0 0.0
    %961 = vmatpush.xpose.msra.mxu0 0.0
    %962 = vmatpush.xpose.msra.mxu0 0.0
    %963 = vmatpush.xpose.msra.mxu0 0.0
    %964 = vmatpush.xpose.msra.mxu0 %v948
    %965 = vmatpush.xpose.msra.mxu0 %v945
    %966 = vmatmul.f32.gmra.mxu0 %v939
    %v967 = vpop.f32.mrf.mxu0
    %v968 = vadd.f32 0.0, %v967
    %969 = vmatmul.f32.gmra.mxu0 %v942
    %v970 = vpop.f32.mrf.mxu0
    %v971 = vadd.f32 0.0, %v970
    %972 = vdwg.mxu0
    %v973 = vmul.f32 %v968, 0.17677669
    %v974 = vmul.f32 %v971, 0.17677669
    %v975 = vadd.f32 %v973, %v408
    %v976 = vadd.f32 %v974, %v409
    %v977 = vsel %vm234, %v975, -inf
    %978 = vmax.xlane.f32.xlu0 %v977
    %v979 = vpop.xlane.xlu0 %978
    %v980 = vsel %vm234, %v976, -inf
    %981 = vmax.xlane.f32.xlu0 %v980
    %v982 = vpop.xlane.xlu0 %981
    %v983 = vsub.f32 %v975, %v979
    %v984 = vsub.f32 %v976, %v982
    %v985 = vmul.f32 %v983, 1.442695
    %v986 = vpow.pop %v985
    %v987 = vmul.f32 %v984, 1.442695
    %v988 = vpow.pop %v987
    %v989 = vsel %vm234, %v986, 0.0
    %990 = vadd.xlane.f32.xlu0 %v989
    %v991 = vpop.xlane.xlu0 %990
    %v992 = vsel %vm234, %v988, 0.0
    %993 = vadd.xlane.f32.xlu0 %v992
    %v994 = vpop.xlane.xlu0 %993
    %v995 = vrcp.pop %v991
    %v996 = vmul.f32 %v991, %v995
    %v997 = vsub.f32 1.0, %v996
    %v998 = vmul.f32 %v995, %v997
    %v999 = vadd.f32 %v995, %v998
    %vm1000 = vweird.f32 %v991
    %vm1001 = vweird.f32 %v995
    %vm1002 = vmor %vm1000, %vm1001
    %v1003 = vsel %vm1002, %v995, %v999
    %v1004 = vand.u32 2147483647, %v991
    %vm1005 = vcmp.eq.f32.partialorder %v1004, 8.507059e+37
    %v1006 = vand.u32 %v991, 2147483648
    %v1007 = vor.u32 1.1754944e-38, %v1006
    %v1008 = vsel %vm1005, %v1007, %v1003
    %v1009 = vmul.f32 %v986, %v1008
    %v1010 = vrcp.pop %v994
    %v1011 = vmul.f32 %v994, %v1010
    %v1012 = vsub.f32 1.0, %v1011
    %v1013 = vmul.f32 %v1010, %v1012
    %v1014 = vadd.f32 %v1010, %v1013
    %vm1015 = vweird.f32 %v994
    %vm1016 = vweird.f32 %v1010
    %vm1017 = vmor %vm1015, %vm1016
    %v1018 = vsel %vm1017, %v1010, %v1014
    %v1019 = vand.u32 2147483647, %v994
    %vm1020 = vcmp.eq.f32.partialorder %v1019, 8.507059e+37
    %v1021 = vand.u32 %v994, 2147483648
    %v1022 = vor.u32 1.1754944e-38, %v1021
    %v1023 = vsel %vm1020, %v1022, %v1018
    %v1024 = vmul.f32 %v988, %v1023
    %v1026 = vsel %vm234, %v1009, 0
    %v1029 = vsel %vm234, %v1024, 0
    %1031 = vmatpush.msra.mxu0 0.0
    %1032 = vmatpush.msra.mxu0 0.0
    %1033 = vmatpush.msra.mxu0 0.0
    %1034 = vmatpush.msra.mxu0 0.0
    %1035 = vmatpush.msra.mxu0 0.0
    %1036 = vmatpush.msra.mxu0 0.0
    %1037 = vmatpush.msra.mxu0 0.0
    %1038 = vmatpush.msra.mxu0 0.0
    %1039 = vmatpush.msra.mxu0 0.0
    %1040 = vmatpush.msra.mxu0 0.0
    %1041 = vmatpush.msra.mxu0 0.0
    %1042 = vmatpush.msra.mxu0 0.0
    %1043 = vmatpush.msra.mxu0 0.0
    %1044 = vmatpush.msra.mxu0 0.0
    %1045 = vmatpush.msra.mxu0 %v936
    %1046 = vmatpush.msra.mxu0 %v933
    %1047 = vmatmul.f32.gmra.mxu0 %v1026
    %v1048 = vpop.f32.mrf.mxu0
    %v1049 = vadd.f32 0.0, %v1048
    %1050 = vmatmul.f32.gmra.mxu0 %v1029
    %v1051 = vpop.f32.mrf.mxu0
    %v1052 = vadd.f32 0.0, %v1051
    %1053 = vdwg.mxu0
    %v1055 = vsel %vm90, %v1049, 0
    %v1058 = vsel %vm90, %v1052, 0
    %1060 = vmatpush.msra.mxu0 0.0
    %1061 = vmatpush.msra.mxu0 0.0
    %1062 = vmatpush.msra.mxu0 0.0
    %1063 = vmatpush.msra.mxu0 0.0
    %1064 = vmatpush.msra.mxu0 0.0
    %1065 = vmatpush.msra.mxu0 0.0
    %1066 = vmatpush.msra.mxu0 0.0
    %1067 = vmatpush.msra.mxu0 0.0
    %1068 = vmatpush.msra.mxu0 0.0
    %1069 = vmatpush.msra.mxu0 0.0
    %1070 = vmatpush.msra.mxu0 0.0
    %1071 = vmatpush.msra.mxu0 0.0
    %1072 = vmatpush.msra.mxu0 %v819
    %1073 = vmatpush.msra.mxu0 %v818
    %1074 = vmatpush.msra.mxu0 %v817
    %1075 = vmatpush.msra.mxu0 %v816
    %1076 = vmatmul.f32.gmra.mxu0 %v1055
    %v1077 = vpop.f32.mrf.mxu0
    %v1078 = vadd.f32 0.0, %v1077
    %1079 = vmatmul.f32.gmra.mxu0 %v1058
    %v1080 = vpop.f32.mrf.mxu0
    %v1081 = vadd.f32 0.0, %v1080
    %1082 = vdwg.mxu0
    %v1083 = vadd.f32 %v858, %v1078
    %v1084 = vadd.f32 %v861, %v1081
    %v1086 = vsel %vm90, %v1083, 0
    %v1089 = vsel %vm90, %v1084, 0
    %1091 = vmatpush.msra.mxu0 0.0
    %1092 = vmatpush.msra.mxu0 0.0
    %1093 = vmatpush.msra.mxu0 0.0
    %1094 = vmatpush.msra.mxu0 0.0
    %1095 = vmatpush.msra.mxu0 0.0
    %1096 = vmatpush.msra.mxu0 0.0
    %1097 = vmatpush.msra.mxu0 0.0
    %1098 = vmatpush.msra.mxu0 0.0
    %1099 = vmatpush.msra.mxu0 0.0
    %1100 = vmatpush.msra.mxu0 0.0
    %1101 = vmatpush.msra.mxu0 0.0
    %1102 = vmatpush.msra.mxu0 0.0
    %1103 = vmatpush.msra.mxu0 %v824
    %1104 = vmatpush.msra.mxu0 %v823
    %1105 = vmatpush.msra.mxu0 %v822
    %1106 = vmatpush.msra.mxu0 %v821
    %1107 = vmatmul.f32.gmra.mxu0 %v1086
    %v1108 = vpop.f32.mrf.mxu0
    %v1109 = vadd.f32 0.0, %v1108
    %1110 = vmatmul.f32.gmra.mxu0 %v1089
    %v1111 = vpop.f32.mrf.mxu0
    %v1112 = vadd.f32 0.0, %v1111
    %1113 = vdwg.mxu0
    %v1114 = vmax.f32 %v1109, 0.0
    %v1115 = vmax.f32 %v1112, 0.0
    %v1117 = vsel %vm374, %v1114, 0
    %v1120 = vsel %vm374, %v1115, 0
    %1122 = vmatpush.msra.mxu0 0.0
    %1123 = vmatpush.msra.mxu0 0.0
    %1124 = vmatpush.msra.mxu0 0.0
    %1125 = vmatpush.msra.mxu0 0.0
    %1126 = vmatpush.msra.mxu0 0.0
    %1127 = vmatpush.msra.mxu0 0.0
    %1128 = vmatpush.msra.mxu0 0.0
    %1129 = vmatpush.msra.mxu0 0.0
    %1130 = vmatpush.msra.mxu0 %v833
    %1131 = vmatpush.msra.mxu0 %v832
    %1132 = vmatpush.msra.mxu0 %v831
    %1133 = vmatpush.msra.mxu0 %v830
    %1134 = vmatpush.msra.mxu0 %v829
    %1135 = vmatpush.msra.mxu0 %v828
    %1136 = vmatpush.msra.mxu0 %v827
    %1137 = vmatpush.msra.mxu0 %v826
    %1138 = vmatmul.f32.gmra.mxu0 %v1117
    %v1139 = vpop.f32.mrf.mxu0
    %v1140 = vadd.f32 0.0, %v1139
    %1141 = vmatmul.f32.gmra.mxu0 %v1120
    %v1142 = vpop.f32.mrf.mxu0
    %v1143 = vadd.f32 0.0, %v1142
    %1144 = vdwg.mxu0
    %v1145 = vadd.f32 %v1083, %v1140
    %v1146 = vadd.f32 %v1084, %v1143
    %v1147 = vld [vmem:[%s2] sm:$0xff]
    %v1148 = vld [vmem:[%s2 + $0x8] sm:$0xff]
    %v1149 = vld [vmem:[%s2 + $0x10] sm:$0xff]
    %v1150 = vld [vmem:[%s2 + $0x18] sm:$0xff]
    %v1151 = vld [vmem:[%s5] sm:$0xff]
    %v1152 = vld [vmem:[%s5 + $0x8] sm:$0xff]
    %v1153 = vld [vmem:[%s5 + $0x10] sm:$0xff]
    %v1154 = vld [vmem:[%s5 + $0x18] sm:$0xff]
    %s1155 = scalar_lea.vmem %s10, 480
    %v1156 = vld [vmem:[%s1155] sm:$0xff]
    %v1157 = vld [vmem:[%s1155 + $0x8] sm:$0xff]
    %v1158 = vld [vmem:[%s1155 + $0x10] sm:$0xff]
    %v1159 = vld [vmem:[%s1155 + $0x18] sm:$0xff]
    %s1160 = scalar_lea.vmem %s10, 512
    %v1161 = vld [vmem:[%s1160] sm:$0xff]
    %v1162 = vld [vmem:[%s1160 + $0x8] sm:$0xff]
    %v1163 = vld [vmem:[%s1160 + $0x10] sm:$0xff]
    %v1164 = vld [vmem:[%s1160 + $0x18] sm:$0xff]
    %s1165 = scalar_lea.vmem %s10, 544
    %v1166 = vld [vmem:[%s1165] sm:$0xff]
    %v1167 = vld [vmem:[%s1165 + $0x8] sm:$0xff]
    %v1168 = vld [vmem:[%s1165 + $0x10] sm:$0xff]
    %v1169 = vld [vmem:[%s1165 + $0x18] sm:$0xff]
    %s1170 = scalar_lea.vmem %s10, 576
    %v1171 = vld [vmem:[%s1170] sm:$0xff]
    %v1172 = vld [vmem:[%s1170 + $0x8] sm:$0xff]
    %v1173 = vld [vmem:[%s1170 + $0x10] sm:$0xff]
    %v1174 = vld [vmem:[%s1170 + $0x18] sm:$0xff]
    %s1175 = scalar_lea.vmem %s10, 608
    %v1176 = vld [vmem:[%s1175] sm:$0xff]
    %v1177 = vld [vmem:[%s1175 + $0x8] sm:$0xff]
    %v1178 = vld [vmem:[%s1175 + $0x10] sm:$0xff]
    %v1179 = vld [vmem:[%s1175 + $0x18] sm:$0xff]
    %s1180 = scalar_lea.vmem %s11, 96
    %v1181 = vld [vmem:[%s1180] sm:$0xff]
    %v1182 = vld [vmem:[%s1180 + $0x8] sm:$0xff]
    %v1183 = vld [vmem:[%s1180 + $0x10] sm:$0xff]
    %v1184 = vld [vmem:[%s1180 + $0x18] sm:$0xff]
    %s1185 = scalar_lea.vmem %s12, 192
    %v1186 = vld [vmem:[%s1185] sm:$0xff]
    %v1187 = vld [vmem:[%s1185 + $0x8] sm:$0xff]
    %v1188 = vld [vmem:[%s1185 + $0x10] sm:$0xff]
    %v1189 = vld [vmem:[%s1185 + $0x18] sm:$0xff]
    %v1190 = vld [vmem:[%s1185 + $0x20] sm:$0xff]
    %v1191 = vld [vmem:[%s1185 + $0x28] sm:$0xff]
    %v1192 = vld [vmem:[%s1185 + $0x30] sm:$0xff]
    %v1193 = vld [vmem:[%s1185 + $0x38] sm:$0xff]
    %v1195 = vsel %vm90, %v1147, 0
    %v1198 = vsel %vm90, %v1148, 0
    %v1201 = vsel %vm90, %v1149, 0
    %v1204 = vsel %vm90, %v1150, 0
    %1206 = vmatpush.msra.mxu0 0.0
    %1207 = vmatpush.msra.mxu0 0.0
    %1208 = vmatpush.msra.mxu0 0.0
    %1209 = vmatpush.msra.mxu0 0.0
    %1210 = vmatpush.msra.mxu0 0.0
    %1211 = vmatpush.msra.mxu0 0.0
    %1212 = vmatpush.msra.mxu0 0.0
    %1213 = vmatpush.msra.mxu0 0.0
    %1214 = vmatpush.msra.mxu0 0.0
    %1215 = vmatpush.msra.mxu0 0.0
    %1216 = vmatpush.msra.mxu0 0.0
    %1217 = vmatpush.msra.mxu0 0.0
    %1218 = vmatpush.msra.mxu0 %v1159
    %1219 = vmatpush.msra.mxu0 %v1158
    %1220 = vmatpush.msra.mxu0 %v1157
    %1221 = vmatpush.msra.mxu0 %v1156
    %1222 = vmatmul.f32.gmra.mxu0 %v1195
    %v1223 = vpop.f32.mrf.mxu0
    %v1224 = vadd.f32 0.0, %v1223
    %1225 = vmatmul.f32.gmra.mxu0 %v1198
    %v1226 = vpop.f32.mrf.mxu0
    %v1227 = vadd.f32 0.0, %v1226
    %1228 = vmatmul.f32.gmra.mxu0 %v1201
    %v1229 = vpop.f32.mrf.mxu0
    %v1230 = vadd.f32 0.0, %v1229
    %1231 = vmatmul.f32.gmra.mxu0 %v1204
    %v1232 = vpop.f32.mrf.mxu0
    %v1233 = vadd.f32 0.0, %v1232
    %1234 = vdwg.mxu0
    %v1236 = vsel %vm90, %v1224, 0
    %v1239 = vsel %vm90, %v1227, 0
    %v1242 = vsel %vm90, %v1230, 0
    %v1245 = vsel %vm90, %v1233, 0
    %1247 = vmatpush.msra.mxu0 0.0
    %1248 = vmatpush.msra.mxu0 0.0
    %1249 = vmatpush.msra.mxu0 0.0
    %1250 = vmatpush.msra.mxu0 0.0
    %1251 = vmatpush.msra.mxu0 0.0
    %1252 = vmatpush.msra.mxu0 0.0
    %1253 = vmatpush.msra.mxu0 0.0
    %1254 = vmatpush.msra.mxu0 0.0
    %1255 = vmatpush.msra.mxu0 0.0
    %1256 = vmatpush.msra.mxu0 0.0
    %1257 = vmatpush.msra.mxu0 0.0
    %1258 = vmatpush.msra.mxu0 0.0
    %1259 = vmatpush.msra.mxu0 %v1164
    %1260 = vmatpush.msra.mxu0 %v1163
    %1261 = vmatpush.msra.mxu0 %v1162
    %1262 = vmatpush.msra.mxu0 %v1161
    %1263 = vmatmul.f32.gmra.mxu0 %v1236
    %v1264 = vpop.f32.mrf.mxu0
    %v1265 = vadd.f32 0.0, %v1264
    %1266 = vmatmul.f32.gmra.mxu0 %v1239
    %v1267 = vpop.f32.mrf.mxu0
    %v1268 = vadd.f32 0.0, %v1267
    %1269 = vmatmul.f32.gmra.mxu0 %v1242
    %v1270 = vpop.f32.mrf.mxu0
    %v1271 = vadd.f32 0.0, %v1270
    %1272 = vmatmul.f32.gmra.mxu0 %v1245
    %v1273 = vpop.f32.mrf.mxu0
    %v1274 = vadd.f32 0.0, %v1273
    %1275 = vdwg.mxu0
    %1276 = vmatpush.msra.mxu0 0.0
    %1277 = vmatpush.msra.mxu0 0.0
    %1278 = vmatpush.msra.mxu0 0.0
    %1279 = vmatpush.msra.mxu0 0.0
    %1280 = vmatpush.msra.mxu0 0.0
    %1281 = vmatpush.msra.mxu0 0.0
    %1282 = vmatpush.msra.mxu0 0.0
    %1283 = vmatpush.msra.mxu0 0.0
    %1284 = vmatpush.msra.mxu0 0.0
    %1285 = vmatpush.msra.mxu0 0.0
    %1286 = vmatpush.msra.mxu0 0.0
    %1287 = vmatpush.msra.mxu0 0.0
    %1288 = vmatpush.msra.mxu0 %v1169
    %1289 = vmatpush.msra.mxu0 %v1168
    %1290 = vmatpush.msra.mxu0 %v1167
    %1291 = vmatpush.msra.mxu0 %v1166
    %1292 = vmatmul.f32.gmra.mxu0 %v1236
    %v1293 = vpop.f32.mrf.mxu0
    %v1294 = vadd.f32 0.0, %v1293
    %1295 = vmatmul.f32.gmra.mxu0 %v1239
    %v1296 = vpop.f32.mrf.mxu0
    %v1297 = vadd.f32 0.0, %v1296
    %1298 = vmatmul.f32.gmra.mxu0 %v1242
    %v1299 = vpop.f32.mrf.mxu0
    %v1300 = vadd.f32 0.0, %v1299
    %1301 = vmatmul.f32.gmra.mxu0 %v1245
    %v1302 = vpop.f32.mrf.mxu0
    %v1303 = vadd.f32 0.0, %v1302
    %1304 = vdwg.mxu0
    %1305 = vmatpush.msra.mxu0 0.0
    %1306 = vmatpush.msra.mxu0 0.0
    %1307 = vmatpush.msra.mxu0 0.0
    %1308 = vmatpush.msra.mxu0 0.0
    %1309 = vmatpush.msra.mxu0 0.0
    %1310 = vmatpush.msra.mxu0 0.0
    %1311 = vmatpush.msra.mxu0 0.0
    %1312 = vmatpush.msra.mxu0 0.0
    %1313 = vmatpush.msra.mxu0 0.0
    %1314 = vmatpush.msra.mxu0 0.0
    %1315 = vmatpush.msra.mxu0 0.0
    %1316 = vmatpush.msra.mxu0 0.0
    %1317 = vmatpush.msra.mxu0 %v1174
    %1318 = vmatpush.msra.mxu0 %v1173
    %1319 = vmatpush.msra.mxu0 %v1172
    %1320 = vmatpush.msra.mxu0 %v1171
    %1321 = vmatmul.f32.gmra.mxu0 %v1236
    %v1322 = vpop.f32.mrf.mxu0
    %v1323 = vadd.f32 0.0, %v1322
    %1324 = vmatmul.f32.gmra.mxu0 %v1239
    %v1325 = vpop.f32.mrf.mxu0
    %v1326 = vadd.f32 0.0, %v1325
    %1327 = vmatmul.f32.gmra.mxu0 %v1242
    %v1328 = vpop.f32.mrf.mxu0
    %v1329 = vadd.f32 0.0, %v1328
    %1330 = vmatmul.f32.gmra.mxu0 %v1245
    %v1331 = vpop.f32.mrf.mxu0
    %v1332 = vadd.f32 0.0, %v1331
    %1333 = vdwg.mxu0
    %v1335 = vsel %vm90, %v1265, 0
    %v1338 = vsel %vm90, %v1268, 0
    %v1341 = vsel %vm90, %v1271, 0
    %v1344 = vsel %vm90, %v1274, 0
    %v1347 = vsel %vm90, %v1294, 0
    %v1350 = vsel %vm90, %v1297, 0
    %v1353 = vsel %vm90, %v1300, 0
    %v1356 = vsel %vm90, %v1303, 0
    %1358 = vmatpush.xpose.msra.mxu0 0.0
    %1359 = vmatpush.xpose.msra.mxu0 0.0
    %1360 = vmatpush.xpose.msra.mxu0 0.0
    %1361 = vmatpush.xpose.msra.mxu0 0.0
    %1362 = vmatpush.xpose.msra.mxu0 0.0
    %1363 = vmatpush.xpose.msra.mxu0 0.0
    %1364 = vmatpush.xpose.msra.mxu0 0.0
    %1365 = vmatpush.xpose.msra.mxu0 0.0
    %1366 = vmatpush.xpose.msra.mxu0 0.0
    %1367 = vmatpush.xpose.msra.mxu0 0.0
    %1368 = vmatpush.xpose.msra.mxu0 0.0
    %1369 = vmatpush.xpose.msra.mxu0 0.0
    %1370 = vmatpush.xpose.msra.mxu0 %v1356
    %1371 = vmatpush.xpose.msra.mxu0 %v1353
    %1372 = vmatpush.xpose.msra.mxu0 %v1350
    %1373 = vmatpush.xpose.msra.mxu0 %v1347
    %1374 = vmatmul.f32.gmra.mxu0 %v1335
    %v1375 = vpop.f32.mrf.mxu0
    %v1376 = vadd.f32 0.0, %v1375
    %1377 = vmatmul.f32.gmra.mxu0 %v1338
    %v1378 = vpop.f32.mrf.mxu0
    %v1379 = vadd.f32 0.0, %v1378
    %1380 = vmatmul.f32.gmra.mxu0 %v1341
    %v1381 = vpop.f32.mrf.mxu0
    %v1382 = vadd.f32 0.0, %v1381
    %1383 = vmatmul.f32.gmra.mxu0 %v1344
    %v1384 = vpop.f32.mrf.mxu0
    %v1385 = vadd.f32 0.0, %v1384
    %1386 = vdwg.mxu0
    %v1387 = vmul.f32 %v1376, 0.17677669
    %v1388 = vmul.f32 %v1379, 0.17677669
    %v1389 = vmul.f32 %v1382, 0.17677669
    %v1390 = vmul.f32 %v1385, 0.17677669
    %v1391 = vadd.f32 %v1387, %v1151
    %v1392 = vadd.f32 %v1388, %v1152
    %v1393 = vadd.f32 %v1389, %v1153
    %v1394 = vadd.f32 %v1390, %v1154
    %v1395 = vsel %vm90, %v1391, -inf
    %1396 = vmax.xlane.f32.xlu0 %v1395
    %v1397 = vpop.xlane.xlu0 %1396
    %v1398 = vsel %vm90, %v1392, -inf
    %1399 = vmax.xlane.f32.xlu0 %v1398
    %v1400 = vpop.xlane.xlu0 %1399
    %v1401 = vsel %vm90, %v1393, -inf
    %1402 = vmax.xlane.f32.xlu0 %v1401
    %v1403 = vpop.xlane.xlu0 %1402
    %v1404 = vsel %vm90, %v1394, -inf
    %1405 = vmax.xlane.f32.xlu0 %v1404
    %v1406 = vpop.xlane.xlu0 %1405
    %v1407 = vsub.f32 %v1391, %v1397
    %v1408 = vsub.f32 %v1392, %v1400
    %v1409 = vsub.f32 %v1393, %v1403
    %v1410 = vsub.f32 %v1394, %v1406
    %v1411 = vmul.f32 %v1407, 1.442695
    %v1412 = vpow.pop %v1411
    %v1413 = vmul.f32 %v1408, 1.442695
    %v1414 = vpow.pop %v1413
    %v1415 = vmul.f32 %v1409, 1.442695
    %v1416 = vpow.pop %v1415
    %v1417 = vmul.f32 %v1410, 1.442695
    %v1418 = vpow.pop %v1417
    %v1419 = vsel %vm90, %v1412, 0.0
    %1420 = vadd.xlane.f32.xlu0 %v1419
    %v1421 = vpop.xlane.xlu0 %1420
    %v1422 = vsel %vm90, %v1414, 0.0
    %1423 = vadd.xlane.f32.xlu0 %v1422
    %v1424 = vpop.xlane.xlu0 %1423
    %v1425 = vsel %vm90, %v1416, 0.0
    %1426 = vadd.xlane.f32.xlu0 %v1425
    %v1427 = vpop.xlane.xlu0 %1426
    %v1428 = vsel %vm90, %v1418, 0.0
    %1429 = vadd.xlane.f32.xlu0 %v1428
    %v1430 = vpop.xlane.xlu0 %1429
    %v1431 = vrcp.pop %v1421
    %v1432 = vmul.f32 %v1421, %v1431
    %v1433 = vsub.f32 1.0, %v1432
    %v1434 = vmul.f32 %v1431, %v1433
    %v1435 = vadd.f32 %v1431, %v1434
    %vm1436 = vweird.f32 %v1421
    %vm1437 = vweird.f32 %v1431
    %vm1438 = vmor %vm1436, %vm1437
    %v1439 = vsel %vm1438, %v1431, %v1435
    %v1440 = vand.u32 2147483647, %v1421
    %vm1441 = vcmp.eq.f32.partialorder %v1440, 8.507059e+37
    %v1442 = vand.u32 %v1421, 2147483648
    %v1443 = vor.u32 1.1754944e-38, %v1442
    %v1444 = vsel %vm1441, %v1443, %v1439
    %v1445 = vmul.f32 %v1412, %v1444
    %v1446 = vrcp.pop %v1424
    %v1447 = vmul.f32 %v1424, %v1446
    %v1448 = vsub.f32 1.0, %v1447
    %v1449 = vmul.f32 %v1446, %v1448
    %v1450 = vadd.f32 %v1446, %v1449
    %vm1451 = vweird.f32 %v1424
    %vm1452 = vweird.f32 %v1446
    %vm1453 = vmor %vm1451, %vm1452
    %v1454 = vsel %vm1453, %v1446, %v1450
    %v1455 = vand.u32 2147483647, %v1424
    %vm1456 = vcmp.eq.f32.partialorder %v1455, 8.507059e+37
    %v1457 = vand.u32 %v1424, 2147483648
    %v1458 = vor.u32 1.1754944e-38, %v1457
    %v1459 = vsel %vm1456, %v1458, %v1454
    %v1460 = vmul.f32 %v1414, %v1459
    %v1461 = vrcp.pop %v1427
    %v1462 = vmul.f32 %v1427, %v1461
    %v1463 = vsub.f32 1.0, %v1462
    %v1464 = vmul.f32 %v1461, %v1463
    %v1465 = vadd.f32 %v1461, %v1464
    %vm1466 = vweird.f32 %v1427
    %vm1467 = vweird.f32 %v1461
    %vm1468 = vmor %vm1466, %vm1467
    %v1469 = vsel %vm1468, %v1461, %v1465
    %v1470 = vand.u32 2147483647, %v1427
    %vm1471 = vcmp.eq.f32.partialorder %v1470, 8.507059e+37
    %v1472 = vand.u32 %v1427, 2147483648
    %v1473 = vor.u32 1.1754944e-38, %v1472
    %v1474 = vsel %vm1471, %v1473, %v1469
    %v1475 = vmul.f32 %v1416, %v1474
    %v1476 = vrcp.pop %v1430
    %v1477 = vmul.f32 %v1430, %v1476
    %v1478 = vsub.f32 1.0, %v1477
    %v1479 = vmul.f32 %v1476, %v1478
    %v1480 = vadd.f32 %v1476, %v1479
    %vm1481 = vweird.f32 %v1430
    %vm1482 = vweird.f32 %v1476
    %vm1483 = vmor %vm1481, %vm1482
    %v1484 = vsel %vm1483, %v1476, %v1480
    %v1485 = vand.u32 2147483647, %v1430
    %vm1486 = vcmp.eq.f32.partialorder %v1485, 8.507059e+37
    %v1487 = vand.u32 %v1430, 2147483648
    %v1488 = vor.u32 1.1754944e-38, %v1487
    %v1489 = vsel %vm1486, %v1488, %v1484
    %v1490 = vmul.f32 %v1418, %v1489
    %v1492 = vsel %vm90, %v1445, 0
    %v1495 = vsel %vm90, %v1460, 0
    %v1498 = vsel %vm90, %v1475, 0
    %v1501 = vsel %vm90, %v1490, 0
    %1503 = vmatpush.msra.mxu0 0.0
    %1504 = vmatpush.msra.mxu0 0.0
    %1505 = vmatpush.msra.mxu0 0.0
    %1506 = vmatpush.msra.mxu0 0.0
    %1507 = vmatpush.msra.mxu0 0.0
    %1508 = vmatpush.msra.mxu0 0.0
    %1509 = vmatpush.msra.mxu0 0.0
    %1510 = vmatpush.msra.mxu0 0.0
    %1511 = vmatpush.msra.mxu0 0.0
    %1512 = vmatpush.msra.mxu0 0.0
    %1513 = vmatpush.msra.mxu0 0.0
    %1514 = vmatpush.msra.mxu0 0.0
    %1515 = vmatpush.msra.mxu0 %v1332
    %1516 = vmatpush.msra.mxu0 %v1329
    %1517 = vmatpush.msra.mxu0 %v1326
    %1518 = vmatpush.msra.mxu0 %v1323
    %1519 = vmatmul.f32.gmra.mxu0 %v1492
    %v1520 = vpop.f32.mrf.mxu0
    %v1521 = vadd.f32 0.0, %v1520
    %1522 = vmatmul.f32.gmra.mxu0 %v1495
    %v1523 = vpop.f32.mrf.mxu0
    %v1524 = vadd.f32 0.0, %v1523
    %1525 = vmatmul.f32.gmra.mxu0 %v1498
    %v1526 = vpop.f32.mrf.mxu0
    %v1527 = vadd.f32 0.0, %v1526
    %1528 = vmatmul.f32.gmra.mxu0 %v1501
    %v1529 = vpop.f32.mrf.mxu0
    %v1530 = vadd.f32 0.0, %v1529
    %1531 = vdwg.mxu0
    %v1533 = vsel %vm90, %v1521, 0
    %v1536 = vsel %vm90, %v1524, 0
    %v1539 = vsel %vm90, %v1527, 0
    %v1542 = vsel %vm90, %v1530, 0
    %1544 = vmatpush.msra.mxu0 0.0
    %1545 = vmatpush.msra.mxu0 0.0
    %1546 = vmatpush.msra.mxu0 0.0
    %1547 = vmatpush.msra.mxu0 0.0
    %1548 = vmatpush.msra.mxu0 0.0
    %1549 = vmatpush.msra.mxu0 0.0
    %1550 = vmatpush.msra.mxu0 0.0
    %1551 = vmatpush.msra.mxu0 0.0
    %1552 = vmatpush.msra.mxu0 0.0
    %1553 = vmatpush.msra.mxu0 0.0
    %1554 = vmatpush.msra.mxu0 0.0
    %1555 = vmatpush.msra.mxu0 0.0
    %1556 = vmatpush.msra.mxu0 %v1179
    %1557 = vmatpush.msra.mxu0 %v1178
    %1558 = vmatpush.msra.mxu0 %v1177
    %1559 = vmatpush.msra.mxu0 %v1176
    %1560 = vmatmul.f32.gmra.mxu0 %v1533
    %v1561 = vpop.f32.mrf.mxu0
    %v1562 = vadd.f32 0.0, %v1561
    %1563 = vmatmul.f32.gmra.mxu0 %v1536
    %v1564 = vpop.f32.mrf.mxu0
    %v1565 = vadd.f32 0.0, %v1564
    %1566 = vmatmul.f32.gmra.mxu0 %v1539
    %v1567 = vpop.f32.mrf.mxu0
    %v1568 = vadd.f32 0.0, %v1567
    %1569 = vmatmul.f32.gmra.mxu0 %v1542
    %v1570 = vpop.f32.mrf.mxu0
    %v1571 = vadd.f32 0.0, %v1570
    %1572 = vdwg.mxu0
    %v1573 = vadd.f32 %v1224, %v1562
    %v1574 = vadd.f32 %v1227, %v1565
    %v1575 = vadd.f32 %v1230, %v1568
    %v1576 = vadd.f32 %v1233, %v1571
    %v1578 = vsel %vm90, %v1573, 0
    %v1581 = vsel %vm90, %v1574, 0
    %v1584 = vsel %vm90, %v1575, 0
    %v1587 = vsel %vm90, %v1576, 0
    %1589 = vmatpush.msra.mxu0 0.0
    %1590 = vmatpush.msra.mxu0 0.0
    %1591 = vmatpush.msra.mxu0 0.0
    %1592 = vmatpush.msra.mxu0 0.0
    %1593 = vmatpush.msra.mxu0 0.0
    %1594 = vmatpush.msra.mxu0 0.0
    %1595 = vmatpush.msra.mxu0 0.0
    %1596 = vmatpush.msra.mxu0 0.0
    %1597 = vmatpush.msra.mxu0 0.0
    %1598 = vmatpush.msra.mxu0 0.0
    %1599 = vmatpush.msra.mxu0 0.0
    %1600 = vmatpush.msra.mxu0 0.0
    %1601 = vmatpush.msra.mxu0 %v1184
    %1602 = vmatpush.msra.mxu0 %v1183
    %1603 = vmatpush.msra.mxu0 %v1182
    %1604 = vmatpush.msra.mxu0 %v1181
    %1605 = vmatmul.f32.gmra.mxu0 %v1578
    %v1606 = vpop.f32.mrf.mxu0
    %v1607 = vadd.f32 0.0, %v1606
    %1608 = vmatmul.f32.gmra.mxu0 %v1581
    %v1609 = vpop.f32.mrf.mxu0
    %v1610 = vadd.f32 0.0, %v1609
    %1611 = vmatmul.f32.gmra.mxu0 %v1584
    %v1612 = vpop.f32.mrf.mxu0
    %v1613 = vadd.f32 0.0, %v1612
    %1614 = vmatmul.f32.gmra.mxu0 %v1587
    %v1615 = vpop.f32.mrf.mxu0
    %v1616 = vadd.f32 0.0, %v1615
    %1617 = vdwg.mxu0
    %v1618 = vmax.f32 %v1607, 0.0
    %v1619 = vmax.f32 %v1610, 0.0
    %v1620 = vmax.f32 %v1613, 0.0
    %v1621 = vmax.f32 %v1616, 0.0
    %v1623 = vsel %vm374, %v1618, 0
    %v1626 = vsel %vm374, %v1619, 0
    %v1629 = vsel %vm374, %v1620, 0
    %v1632 = vsel %vm374, %v1621, 0
    %1634 = vmatpush.msra.mxu0 0.0
    %1635 = vmatpush.msra.mxu0 0.0
    %1636 = vmatpush.msra.mxu0 0.0
    %1637 = vmatpush.msra.mxu0 0.0
    %1638 = vmatpush.msra.mxu0 0.0
    %1639 = vmatpush.msra.mxu0 0.0
    %1640 = vmatpush.msra.mxu0 0.0
    %1641 = vmatpush.msra.mxu0 0.0
    %1642 = vmatpush.msra.mxu0 %v1193
    %1643 = vmatpush.msra.mxu0 %v1192
    %1644 = vmatpush.msra.mxu0 %v1191
    %1645 = vmatpush.msra.mxu0 %v1190
    %1646 = vmatpush.msra.mxu0 %v1189
    %1647 = vmatpush.msra.mxu0 %v1188
    %1648 = vmatpush.msra.mxu0 %v1187
    %1649 = vmatpush.msra.mxu0 %v1186
    %1650 = vmatmul.f32.gmra.mxu0 %v1623
    %v1651 = vpop.f32.mrf.mxu0
    %v1652 = vadd.f32 0.0, %v1651
    %1653 = vmatmul.f32.gmra.mxu0 %v1626
    %v1654 = vpop.f32.mrf.mxu0
    %v1655 = vadd.f32 0.0, %v1654
    %1656 = vmatmul.f32.gmra.mxu0 %v1629
    %v1657 = vpop.f32.mrf.mxu0
    %v1658 = vadd.f32 0.0, %v1657
    %1659 = vmatmul.f32.gmra.mxu0 %v1632
    %v1660 = vpop.f32.mrf.mxu0
    %v1661 = vadd.f32 0.0, %v1660
    %1662 = vdwg.mxu0
    %v1663 = vadd.f32 %v1573, %v1652
    %v1664 = vadd.f32 %v1574, %v1655
    %v1665 = vadd.f32 %v1575, %v1658
    %v1666 = vadd.f32 %v1576, %v1661
    %v1667 = vld [vmem:[%s8] sm:$0x3]
    %v1669 = vsel %vm90, %v1667, 0
    %1671 = vmatpush.msra.mxu0 0.0
    %1672 = vmatpush.msra.mxu0 0.0
    %1673 = vmatpush.msra.mxu0 0.0
    %1674 = vmatpush.msra.mxu0 0.0
    %1675 = vmatpush.msra.mxu0 0.0
    %1676 = vmatpush.msra.mxu0 0.0
    %1677 = vmatpush.msra.mxu0 0.0
    %1678 = vmatpush.msra.mxu0 0.0
    %1679 = vmatpush.msra.mxu0 0.0
    %1680 = vmatpush.msra.mxu0 0.0
    %1681 = vmatpush.msra.mxu0 0.0
    %1682 = vmatpush.msra.mxu0 0.0
    %1683 = vmatpush.msra.mxu0 %v1666
    %1684 = vmatpush.msra.mxu0 %v1665
    %1685 = vmatpush.msra.mxu0 %v1664
    %1686 = vmatpush.msra.mxu0 %v1663
    %1687 = vmatmul.f32.gmra.mxu0 %v1669
    %v1688 = vpop.f32.mrf.mxu0
    %v1689 = vadd.f32 0.0, %v1688
    %1690 = vdwg.mxu0
    %v1691 = vld [vmem:[%s7] sm:$0x3]
    %v1693 = vsel %vm234, %v1691, 0
    %1695 = vmatpush.msra.mxu0 0.0
    %1696 = vmatpush.msra.mxu0 0.0
    %1697 = vmatpush.msra.mxu0 0.0
    %1698 = vmatpush.msra.mxu0 0.0
    %1699 = vmatpush.msra.mxu0 0.0
    %1700 = vmatpush.msra.mxu0 0.0
    %1701 = vmatpush.msra.mxu0 0.0
    %1702 = vmatpush.msra.mxu0 0.0
    %1703 = vmatpush.msra.mxu0 0.0
    %1704 = vmatpush.msra.mxu0 0.0
    %1705 = vmatpush.msra.mxu0 0.0
    %1706 = vmatpush.msra.mxu0 0.0
    %1707 = vmatpush.msra.mxu0 0.0
    %1708 = vmatpush.msra.mxu0 0.0
    %1709 = vmatpush.msra.mxu0 %v1146
    %1710 = vmatpush.msra.mxu0 %v1145
    %1711 = vmatmul.f32.gmra.mxu0 %v1693
    %v1712 = vpop.f32.mrf.mxu0
    %v1713 = vadd.f32 0.0, %v1712
    %1714 = vdwg.mxu0
    %v1715 = vmul.f32 %v1689, %v1689
    %vm1716 = vcmask 254976
    %v1717 = vsel %vm1716, %v1715, 0.0
    %1718 = vadd.xlane.f32.xlu0 %v1717
    %v1719 = vpop.xlane.xlu0 %1718
    %v1720 = vrsqrt.pop %v1719
    %v1721 = vmul.f32 %v1720, %v1719
    %v1722 = vmul.f32 %v1721, %v1720
    %v1723 = vmul.f32 0.5, %v1722
    %v1724 = vsub.f32 1.5, %v1723
    %v1725 = vmul.f32 %v1720, %v1724
    %v1726 = vmul.f32 %v1719, %v1725
    %vm1727 = vcmp.eq.f32.partialorder %v1719, inf
    %v1728 = vsel %vm1727, %v1719, %v1726
    %vm1729 = vcmp.eq.f32.partialorder %v1719, 0.0
    %v1730 = vand.u32 %v1719, 2147483648
    %v1731 = vsel %vm1729, %v1730, %v1728
    %v1732 = vmax.f32 %v1731, 1e-12
    %v1733 = vrcp.pop %v1732
    %v1734 = vmul.f32 %v1732, %v1733
    %v1735 = vsub.f32 1.0, %v1734
    %v1736 = vmul.f32 %v1733, %v1735
    %v1737 = vadd.f32 %v1733, %v1736
    %vm1738 = vweird.f32 %v1732
    %vm1739 = vweird.f32 %v1733
    %vm1740 = vmor %vm1738, %vm1739
    %v1741 = vsel %vm1740, %v1733, %v1737
    %v1742 = vand.u32 2147483647, %v1732
    %vm1743 = vcmp.eq.f32.partialorder %v1742, 8.507059e+37
    %v1744 = vand.u32 %v1732, 2147483648
    %v1745 = vor.u32 1.1754944e-38, %v1744
    %v1746 = vsel %vm1743, %v1745, %v1741
    %v1747 = vmul.f32 %v1689, %v1746
    %v1748 = vmul.f32 %v1713, %v1713
    %v1749 = vsel %vm1716, %v1748, 0.0
    %1750 = vadd.xlane.f32.xlu0 %v1749
    %v1751 = vpop.xlane.xlu0 %1750
    %v1752 = vrsqrt.pop %v1751
    %v1753 = vmul.f32 %v1752, %v1751
    %v1754 = vmul.f32 %v1753, %v1752
    %v1755 = vmul.f32 0.5, %v1754
    %v1756 = vsub.f32 1.5, %v1755
    %v1757 = vmul.f32 %v1752, %v1756
    %v1758 = vmul.f32 %v1751, %v1757
    %vm1759 = vcmp.eq.f32.partialorder %v1751, inf
    %v1760 = vsel %vm1759, %v1751, %v1758
    %vm1761 = vcmp.eq.f32.partialorder %v1751, 0.0
    %v1762 = vand.u32 %v1751, 2147483648
    %v1763 = vsel %vm1761, %v1762, %v1760
    %v1764 = vmax.f32 %v1763, 1e-12
    %v1765 = vrcp.pop %v1764
    %v1766 = vmul.f32 %v1764, %v1765
    %v1767 = vsub.f32 1.0, %v1766
    %v1768 = vmul.f32 %v1765, %v1767
    %v1769 = vadd.f32 %v1765, %v1768
    %vm1770 = vweird.f32 %v1764
    %vm1771 = vweird.f32 %v1765
    %vm1772 = vmor %vm1770, %vm1771
    %v1773 = vsel %vm1772, %v1765, %v1769
    %v1774 = vand.u32 2147483647, %v1764
    %vm1775 = vcmp.eq.f32.partialorder %v1774, 8.507059e+37
    %v1776 = vand.u32 %v1764, 2147483648
    %v1777 = vor.u32 1.1754944e-38, %v1776
    %v1778 = vsel %vm1775, %v1777, %v1773
    %v1779 = vmul.f32 %v1713, %v1778
    %1780 = vst.msk [vmem:[#allocation3] sm:$0x3] %vm1716, %v1779
    %1781 = vst.msk [vmem:[#allocation5] sm:$0x3] %vm1716, %v1747
    %s1782 = sld [smem:[#allocation2]]
    %v1784 = vsel %vm90, %v1747, 0
    %v1787 = vsel %vm90, %v1779, 0
    %1789 = vmatpush.xpose.msra.mxu0 0.0
    %1790 = vmatpush.xpose.msra.mxu0 0.0
    %1791 = vmatpush.xpose.msra.mxu0 0.0
    %1792 = vmatpush.xpose.msra.mxu0 0.0
    %1793 = vmatpush.xpose.msra.mxu0 0.0
    %1794 = vmatpush.xpose.msra.mxu0 0.0
    %1795 = vmatpush.xpose.msra.mxu0 0.0
    %1796 = vmatpush.xpose.msra.mxu0 0.0
    %1797 = vmatpush.xpose.msra.mxu0 0.0
    %1798 = vmatpush.xpose.msra.mxu0 0.0
    %1799 = vmatpush.xpose.msra.mxu0 0.0
    %1800 = vmatpush.xpose.msra.mxu0 0.0
    %1801 = vmatpush.xpose.msra.mxu0 0.0
    %1802 = vmatpush.xpose.msra.mxu0 0.0
    %1803 = vmatpush.xpose.msra.mxu0 0.0
    %1804 = vmatpush.xpose.msra.mxu0 %v1787
    %1805 = vmatmul.f32.gmra.mxu0 %v1784
    %v1806 = vpop.f32.mrf.mxu0
    %v1807 = vadd.f32 0.0, %v1806
    %1808 = vdwg.mxu0
    %v1809 = vstv %s1782
    %v1810 = vmul.f32 %v1809, %v1807
    %v1811 = vlaneseq
    %v1812 = vshrl.u32 %v1811, 7
    %v1813 = vlaneseq
    %v1814 = vand.u32 %v1813, 127
    %vm1815 = vcmp.eq.s32.totalorder %v1812, %v1814
    %v1816 = vsel %vm1815, 1, 0
    %v1817 = vcvt.s32.f32 %v1816
    %v1818 = vmul.f32 %v1810, %v1817
    %vm1819 = vcmask 9216
    %v1820 = vsel %vm1819, %v1818, 0.0
    %1821 = vadd.xlane.f32.xlu0 %v1820
    %v1822 = vpop.xlane.xlu0 %1821
    %v1823 = vsel %vm1819, %v1810, -inf
    %1824 = vmax.xlane.f32.xlu0 %v1823
    %v1825 = vpop.xlane.xlu0 %1824
    %v1826 = vsub.f32 %v1810, %v1825
    %v1827 = vmul.f32 %v1826, 1.442695
    %v1828 = vpow.pop %v1827
    %v1829 = vsel %vm1819, %v1828, 0.0
    %1830 = vadd.xlane.f32.xlu0 %v1829
    %v1831 = vpop.xlane.xlu0 %1830
    %v1832 = vlog2.pop %v1831
    %v1833 = vmul.f32 %v1832, 0.6931472
    %v1834 = vadd.f32 %v1825, %v1833
    %v1835 = vsub.f32 %v1834, %v1822
    %v1836 = vrot.slane %v1820, 4
    %v1837 = vadd.f32 %v1820, %v1836
    %v1838 = vrot.slane %v1837, 2
    %v1839 = vadd.f32 %v1837, %v1838
    %v1840 = vrot.slane %v1839, 1
    %v1841 = vadd.f32 %v1839, %v1840
    %v1842 = vrot.slane %v1823, 4
    %v1843 = vmax.f32 %v1823, %v1842
    %v1844 = vrot.slane %v1843, 2
    %v1845 = vmax.f32 %v1843, %v1844
    %v1846 = vrot.slane %v1845, 1
    %v1847 = vmax.f32 %v1845, %v1846
    %v1848 = vsub.f32 %v1810, %v1847
    %v1849 = vmul.f32 %v1848, 1.442695
    %v1850 = vpow.pop %v1849
    %v1851 = vsel %vm1819, %v1850, 0.0
    %v1852 = vrot.slane %v1851, 4
    %v1853 = vadd.f32 %v1851, %v1852
    %v1854 = vrot.slane %v1853, 2
    %v1855 = vadd.f32 %v1853, %v1854
    %v1856 = vrot.slane %v1855, 1
    %v1857 = vadd.f32 %v1855, %v1856
    %v1858 = vlog2.pop %v1857
    %v1859 = vmul.f32 %v1858, 0.6931472
    %v1860 = vadd.f32 %v1847, %v1859
    %v1861 = vsub.f32 %v1860, %v1841
    %vm1862 = vcmask 1024
    %v1863 = vsel %vm1862, %v1835, 0.0
    %1864 = vadd.xlane.f32.xlu0 %v1863
    %v1865 = vpop.xlane.xlu0 %1864
    %v1866 = vrot.slane %v1865, 4
    %v1867 = vadd.f32 %v1865, %v1866
    %v1868 = vrot.slane %v1867, 2
    %v1869 = vadd.f32 %v1867, %v1868
    %v1870 = vrot.slane %v1869, 1
    %v1871 = vadd.f32 %v1869, %v1870
    %s1872 = vtos %v1871
    %v1873 = vstv %s1872
    %vm1874 = vcmask 8192
    %v1875 = vsel %vm1874, %v1861, 0.0
    %1876 = vadd.xlane.f32.xlu0 %v1875
    %v1877 = vpop.xlane.xlu0 %1876
    %v1878 = vrot.slane %v1877, 4
    %v1879 = vadd.f32 %v1877, %v1878
    %v1880 = vrot.slane %v1879, 2
    %v1881 = vadd.f32 %v1879, %v1880
    %v1882 = vrot.slane %v1881, 1
    %v1883 = vadd.f32 %v1881, %v1882
    %s1884 = vtos %v1883
    %v1885 = vstv %s1884
    %v1886 = vadd.f32 %v1873, %v1885
    %v1887 = vrcp.pop 4.0
    %v1888 = vmul.f32 4.0, %v1887
    %v1889 = vsub.f32 1.0, %v1888
    %v1890 = vmul.f32 %v1887, %v1889
    %v1891 = vadd.f32 %v1887, %v1890
    %vm1892 = vweird.f32 %v1887
    %v1893 = vsel %vm1892, %v1887, %v1891
    %v1894 = vmul.f32 %v1886, %v1893
    %vm1895 = vcmask 0
    %1896 = vst.msk [vmem:[#allocation7] sm:$0x1] %vm1895, %v1894
    // Predicated region
    $region54: #{_forward_core.1} parent=1 // pred_check
      _
    $region55: #{_forward_core.1} parent=1 // pred_check_branch
      %1898 = sbr.rel (0) target = $region57
    $region56: #{_forward_core.1} parent=1 // pred_region
      %1900 = vsyncadd [#allocation4], 0
      %s1902 = sshll.u32 [#allocation3], 4
      %s1903 = int_to_ptr.vmem [resolvable:$true] %s1902
      %s1904 = sshll.u32 %s13, 4
      %s1905 = int_to_ptr.hbm [resolvable:$true] %s1904
      %1907 = dma.vmem_to_hbm [thread:$0]  %s1903, 32, %s1905, [#allocation4]
    $region57: #{_forward_core.1} parent=1 // pred_fallthru
      _
    // Predicated region
    $region58: #{_forward_core.1} parent=1 // pred_check
      _
    $region59: #{_forward_core.1} parent=1 // pred_check_branch
      %1909 = sbr.rel (0) target = $region61
    $region60: #{_forward_core.1} parent=1 // pred_region
      %1911 = vsyncadd [#allocation6], 0
      %s1913 = sshll.u32 [#allocation5], 4
      %s1914 = int_to_ptr.vmem [resolvable:$true] %s1913
      %s1915 = sshll.u32 %s14, 4
      %s1916 = int_to_ptr.hbm [resolvable:$true] %s1915
      %1918 = dma.vmem_to_hbm [thread:$0]  %s1914, 32, %s1916, [#allocation6]
    $region61: #{_forward_core.1} parent=1 // pred_fallthru
      _
    // Predicated region
    $region62: #{_forward_core.1} parent=1 // pred_check
      _
    $region63: #{_forward_core.1} parent=1 // pred_check_branch
      %1920 = sbr.rel (0) target = $region65
    $region64: #{_forward_core.1} parent=1 // pred_region
      %1922 = vsyncadd [#allocation6], 0
      %s1924 = sshll.u32 [#allocation7], 4
      %s1925 = int_to_ptr.vmem [resolvable:$true] %s1924
      %s1926 = sshll.u32 %s15, 4
      %s1927 = int_to_ptr.hbm [resolvable:$true] %s1926
      %1929 = dma.vmem_to_hbm [thread:$0]  %s1925, 16, %s1927, [#allocation6]
    $region65: #{_forward_core.1} parent=1 // pred_fallthru
      _
    // Predicated region
    $region66: #{_forward_core.1} parent=1 // pred_check
      _
    $region67: #{_forward_core.1} parent=1 // pred_check_branch
      %1931 = sbr.rel (0) target = $region69
    $region68: #{_forward_core.1} parent=1 // pred_region
      %1933 = dma.done [#allocation4], 32
    $region69: #{_forward_core.1} parent=1 // pred_fallthru
      _
    // Predicated region
    $region70: #{_forward_core.1} parent=1 // pred_check
      _
    $region71: #{_forward_core.1} parent=1 // pred_check_branch
      %1935 = sbr.rel (0) target = $region73
    $region72: #{_forward_core.1} parent=1 // pred_region
      %1937 = dma.done [#allocation6], 32
    $region73: #{_forward_core.1} parent=1 // pred_fallthru
      _
    // Predicated region
    $region74: #{_forward_core.1} parent=1 // pred_check
      _
    $region75: #{_forward_core.1} parent=1 // pred_check_branch
      %1939 = sbr.rel (0) target = $region77
    $region76: #{_forward_core.1} parent=1 // pred_region
      %1941 = dma.done [#allocation6], 16
    $region77: #{_forward_core.1} parent=1 // pred_fallthru
      _
    %1942 = vsyncpa [#allocation4], 1
    %1943 = vsyncpa [#allocation6], 1

</llo_original>
